<compile_context>
chip_gen: v5e
topology: v5e:2x2
jax: 0.10.0
libtpu: 0.0.40
codegen_flags: <defaults>
</compile_context>

<pallas_src>
import functools

import jax
import jax.numpy as jnp
from jax import lax
from jax.experimental import pallas as pl
from jax.experimental.pallas import tpu as pltpu


def _silu(x):
    return x * jax.nn.sigmoid(x)


def _layer_norm(x, eps):
    # F.layer_norm with no elementwise affine (weight/bias == None).
    mean = jnp.mean(x, axis=-1, keepdims=True)
    var = jnp.mean(jnp.square(x - mean), axis=-1, keepdims=True)
    return (x - mean) * lax.rsqrt(var + eps)


def hstu_stack_kernel(lengths_ref,                       # SMEM scalar prefetch
                      x_ref, wu_ref, wv_ref, wq_ref, wk_ref, wo_ref, bo_ref,
                      out_ref,
                      xres_ref,                          # VMEM residual stream
                      *, num_heads, linear_dim, attn_dim, seq_max, eps,
                      num_layers):
    """All SequentialTransductionUnitJagged layers for one batch element.

    Grid = (B, L): batch axis parallel, layer axis sequential (residual carry).
    """
    b = pl.program_id(0)
    layer = pl.program_id(1)
    n = seq_max
    seq_len = lengths_ref[b]

    # Masks rebuilt on-chip from jagged lengths (no O(N^2) HBM mask traffic).
    row_ids = lax.broadcasted_iota(jnp.int32, (n, n), 0)
    col_ids = lax.broadcasted_iota(jnp.int32, (n, n), 1)
    attn_mask = jnp.logical_and(col_ids <= row_ids,          # causal
                                col_ids < seq_len)           # key validity
    attn_mask = attn_mask.astype(jnp.float32)                # (N, N)
    row_valid = (lax.broadcasted_iota(jnp.int32, (n, 1), 0) <
                 seq_len).astype(jnp.float32)                # (N, 1)

    # Layer 0: pull the residual stream into VMEM (padded rows zeroed, which
    # mirrors dense_to_jagged dropping the padded positions).
    @pl.when(layer == 0)
    def _():
        xres_ref[...] = x_ref[0] * row_valid

    x = xres_ref[...]                                        # (N, D) f32

    # ---- input LayerNorm (f32) + per-head u/v/q/k projections + SiLU --------
    nx_b = _layer_norm(x, eps).astype(jnp.bfloat16)

    inv_n = 1.0 / n
    u_heads = []
    attn_heads = []
    for h in range(num_heads):      # static unroll; every operand lane-dense
        uh = _silu(jnp.dot(nx_b, wu_ref[0, h],
                           preferred_element_type=jnp.float32))      # (N, Lh)
        vh = _silu(jnp.dot(nx_b, wv_ref[0, h],
                           preferred_element_type=jnp.float32))      # (N, Lh)
        qh = _silu(jnp.dot(nx_b, wq_ref[0, h],
                           preferred_element_type=jnp.float32))      # (N, A)
        kh = _silu(jnp.dot(nx_b, wk_ref[0, h],
                           preferred_element_type=jnp.float32))      # (N, A)
        # q k^T without a materialized transpose: contract the last axes.
        s = lax.dot_general(qh.astype(jnp.bfloat16), kh.astype(jnp.bfloat16),
                            dimension_numbers=(((1,), (1,)), ((), ())),
                            preferred_element_type=jnp.float32)      # (N, N)
        s = _silu(s) * inv_n * attn_mask
        attn_heads.append(jnp.dot(s.astype(jnp.bfloat16),
                                  vh.astype(jnp.bfloat16),
                                  preferred_element_type=jnp.float32))  # (N,Lh)
        u_heads.append(uh)

    # ---- LayerNorm over the joint (num_heads * linear_dim) feature axis -----
    hl = float(num_heads * linear_dim)
    sum_a = jnp.zeros((n, 1), jnp.float32)
    for ah in attn_heads:
        sum_a = sum_a + jnp.sum(ah, axis=-1, keepdims=True)
    mean = sum_a * (1.0 / hl)
    sum_sq = jnp.zeros((n, 1), jnp.float32)
    for ah in attn_heads:
        d = ah - mean
        sum_sq = sum_sq + jnp.sum(d * d, axis=-1, keepdims=True)
    inv_std = lax.rsqrt(sum_sq * (1.0 / hl) + eps)

    # ---- gate (u * a), output projection, residual ---------------------------
    # concat_ua == False.
    # TODO(synk): dropout on o_input is omitted (eval mode -> identity).
    y = bo_ref[0]                                            # (1, D) f32 bias
    for h in range(num_heads):
        a_h = (attn_heads[h] - mean) * inv_std               # (N, Lh)
        o_h = (u_heads[h] * a_h).astype(jnp.bfloat16)
        y = y + jnp.dot(o_h, wo_ref[0, h],
                        preferred_element_type=jnp.float32)  # (N, D)
    x_new = y + x
    xres_ref[...] = x_new                                    # carry to next layer

    # Only the last layer's residual stream goes back to HBM (padded rows = 0,
    # matching jagged_to_padded_dense with padding_value=0).
    @pl.when(layer == num_layers - 1)
    def _():
        out_ref[0] = (x_new * row_valid).astype(out_ref.dtype)


def hstu_jagged_forward(x, x_offsets, params, *, num_heads, linear_dim,
                        attn_dim, eps=1e-6):
    """HSTUJagged.forward: padded dense (B, N, D) in -> padded dense out.

    params: list of per-layer (uvqk (D, 2*dl+2*da), o_weight_T (dl, D),
    o_bias (1, D)) float32 tensors, exactly the module's parameter shapes.
    """
    # TODO(synk): relative attention bias (all_timestamps) and the
    # delta_x_offsets / cache incremental-decode path are not implemented
    # (this config runs with all_timestamps=None, cache=None).
    B, N, D = x.shape
    L = len(params)
    H, Lh, A = num_heads, linear_dim, attn_dim
    dl, da = Lh * H, A * H
    lengths = (x_offsets[1:] - x_offsets[:-1]).astype(jnp.int32)     # (B,)

    # Pre-split weights head-major so every in-kernel tile is lane-dense, and
    # cast MXU operands to bf16 (halves weight DMA/VMEM; accumulation stays f32).
    wu, wv, wq, wk, wo, bo = [], [], [], [], [], []
    for uvqk, ow, ob in params:
        wu.append(uvqk[:, 0 * dl:1 * dl].reshape(D, H, Lh).transpose(1, 0, 2))
        wv.append(uvqk[:, 1 * dl:2 * dl].reshape(D, H, Lh).transpose(1, 0, 2))
        wq.append(uvqk[:, 2 * dl:2 * dl + da].reshape(D, H, A).transpose(1, 0, 2))
        wk.append(uvqk[:, 2 * dl + da:2 * dl + 2 * da]
                  .reshape(D, H, A).transpose(1, 0, 2))
        wo.append(ow.reshape(H, Lh, D))      # rows of W^T are head-major
        bo.append(ob.reshape(1, D))
    wu = jnp.stack(wu).astype(jnp.bfloat16)  # (L, H, D, Lh)
    wv = jnp.stack(wv).astype(jnp.bfloat16)  # (L, H, D, Lh)
    wq = jnp.stack(wq).astype(jnp.bfloat16)  # (L, H, D, A)
    wk = jnp.stack(wk).astype(jnp.bfloat16)  # (L, H, D, A)
    wo = jnp.stack(wo).astype(jnp.bfloat16)  # (L, H, Lh, D)
    bo = jnp.stack(bo).astype(jnp.float32)   # (L, 1, D)

    kernel = functools.partial(
        hstu_stack_kernel, num_heads=H, linear_dim=Lh, attn_dim=A,
        seq_max=N, eps=eps, num_layers=L)

    grid_spec = pltpu.PrefetchScalarGridSpec(
        num_scalar_prefetch=1,               # lengths -> SMEM
        grid=(B, L),                         # batch (parallel) x layer (seq.)
        in_specs=[
            pl.BlockSpec((1, N, D), lambda b, l, lens: (b, 0, 0)),        # x
            pl.BlockSpec((1, H, D, Lh), lambda b, l, lens: (l, 0, 0, 0)),  # wu
            pl.BlockSpec((1, H, D, Lh), lambda b, l, lens: (l, 0, 0, 0)),  # wv
            pl.BlockSpec((1, H, D, A), lambda b, l, lens: (l, 0, 0, 0)),   # wq
            pl.BlockSpec((1, H, D, A), lambda b, l, lens: (l, 0, 0, 0)),   # wk
            pl.BlockSpec((1, H, Lh, D), lambda b, l, lens: (l, 0, 0, 0)),  # wo
            pl.BlockSpec((1, 1, D), lambda b, l, lens: (l, 0, 0)),         # bo
        ],
        out_specs=pl.BlockSpec((1, N, D), lambda b, l, lens: (b, 0, 0)),
        scratch_shapes=[pltpu.VMEM((N, D), jnp.float32)],   # residual stream
    )
    return pl.pallas_call(
        kernel,
        out_shape=jax.ShapeDtypeStruct((B, N, D), x.dtype),
        grid_spec=grid_spec,
        compiler_params=pltpu.CompilerParams(
            dimension_semantics=("parallel", "arbitrary"),
            vmem_limit_bytes=64 * 1024 * 1024),
    )(lengths, x, wu, wv, wq, wk, wo, bo)


def hstu_reference(x, x_offsets, params, *, num_heads, linear_dim, attn_dim,
                   eps=1e-6):
    """Pure-JAX padded-dense reference of the PyTorch forward, with the same
    bf16 MXU-boundary casts as the kernel (for a tight numerical check)."""
    B, N, D = x.shape
    H, Lh, A = num_heads, linear_dim, attn_dim
    dl, da = Lh * H, A * H
    lengths = x_offsets[1:] - x_offsets[:-1]
    valid = (jnp.arange(N)[None, :] < lengths[:, None]).astype(jnp.float32)
    causal = jnp.tril(jnp.ones((N, N), jnp.float32))
    mask = causal[None, :, :] * valid[:, None, :]            # (B, N, N)
    x = x * valid[:, :, None]
    for uvqk, ow, ob in params:
        nx = _layer_norm(x, eps)
        mm = jnp.einsum('bnd,df->bnf', nx.astype(jnp.bfloat16),
                        uvqk.astype(jnp.bfloat16),
                        preferred_element_type=jnp.float32)
        mm = _silu(mm)
        u = mm[..., :dl]
        v = mm[..., dl:2 * dl]
        q = mm[..., 2 * dl:2 * dl + da]
        k = mm[..., 2 * dl + da:2 * dl + 2 * da]
        qh = q.reshape(B, N, H, A).astype(jnp.bfloat16)
        kh = k.reshape(B, N, H, A).astype(jnp.bfloat16)
        vh = v.reshape(B, N, H, Lh).astype(jnp.bfloat16)
        s = jnp.einsum('bnha,bmha->bhnm', qh, kh,
                       preferred_element_type=jnp.float32)
        s = _silu(s) * (1.0 / N)
        s = s * mask[:, None, :, :]
        attn = jnp.einsum('bhnm,bmhl->bnhl', s.astype(jnp.bfloat16), vh,
                          preferred_element_type=jnp.float32).reshape(B, N, dl)
        a = _layer_norm(attn, eps)
        o_in = (u * a).astype(jnp.bfloat16)
        y = jnp.einsum('bnf,fd->bnd', o_in, ow.astype(jnp.bfloat16),
                       preferred_element_type=jnp.float32) + ob.reshape(1, 1, D)
        x = (y + x) * valid[:, :, None]
    return x


if __name__ == "__main__":
    # Small config consistent with SequentialTransductionUnitJagged.__init__.
    B, N, D = 2, 8, 32
    num_heads, linear_dim, attn_dim = 2, 16, 16
    num_layers = 2
    eps = 1e-6   # matches the module's epsilon default (1e-06)

    key = jax.random.PRNGKey(0)
    k_x, k_p = jax.random.split(key)

    # Inputs (padded dense, jagged lengths via x_offsets).
    x = jax.random.normal(k_x, (B, N, D), dtype=jnp.float32)
    lengths = jnp.array([5, 8], dtype=jnp.int32)
    x_offsets = jnp.concatenate(
        [jnp.zeros((1,), jnp.int32), jnp.cumsum(lengths)]).astype(jnp.int32)

    # Deterministic parameter init (matches shapes in __init__).
    params = []
    uvqk_cols = linear_dim * 2 * num_heads + attn_dim * num_heads * 2
    dl = linear_dim * num_heads
    for _ in range(num_layers):
        k_p, k1, k2, k3 = jax.random.split(k_p, 4)
        uvqk = 0.02 * jax.random.normal(k1, (D, uvqk_cols), dtype=jnp.float32)
        # torch Linear weight is (out=D, in=dl), xavier_uniform; stored as W^T.
        bound_w = (6.0 / (dl + D)) ** 0.5
        ow = jax.random.uniform(k2, (dl, D), jnp.float32, -bound_w, bound_w)
        bound_b = 1.0 / (dl ** 0.5)
        ob = jax.random.uniform(k3, (1, D), jnp.float32, -bound_b, bound_b)
        params.append((uvqk, ow, ob))

    y = hstu_jagged_forward(
        x, x_offsets, params,
        num_heads=num_heads, linear_dim=linear_dim, attn_dim=attn_dim, eps=eps)
    jax.block_until_ready(y)

    y_ref = hstu_reference(
        x, x_offsets, params,
        num_heads=num_heads, linear_dim=linear_dim, attn_dim=attn_dim, eps=eps)

    assert y.shape == (B, N, D)
    assert bool(jnp.all(jnp.isfinite(y)))
    assert bool(jnp.allclose(y, y_ref, atol=2e-3, rtol=2e-2))
    print("KERNEL_OK")
</pallas_src>

<mosaic_0001>
module attributes {stable_mosaic.version = 11 : i64} {
  func.func @hstu_stack_kernel(%arg0: i32, %arg1: i32, %arg2: memref<2xi32, #tpu.memory_space<smem>>, %arg3: memref<1x8x32xf32, #tpu.memory_space<vmem>>, %arg4: memref<1x2x32x16xbf16, #tpu.memory_space<vmem>>, %arg5: memref<1x2x32x16xbf16, #tpu.memory_space<vmem>>, %arg6: memref<1x2x32x16xbf16, #tpu.memory_space<vmem>>, %arg7: memref<1x2x32x16xbf16, #tpu.memory_space<vmem>>, %arg8: memref<1x2x16x32xbf16, #tpu.memory_space<vmem>>, %arg9: memref<1x1x32xf32, #tpu.memory_space<vmem>>, %arg10: memref<1x8x32xf32, #tpu.memory_space<vmem>>, %arg11: memref<8x32xf32, #tpu.memory_space<vmem>>) attributes {dimension_semantics = [#tpu.dimension_semantics<parallel>, #tpu.dimension_semantics<arbitrary>], iteration_bounds = array<i64: 2, 2>, scalar_prefetch = 1 : i64, scratch_operands = 1 : i64, tpu.core_type = #tpu.core_type<tc>, window_params = [{transform_indices = @transform_0, window_bounds = array<i64: 1, 8, 32>}, {transform_indices = @transform_1, window_bounds = array<i64: 1, 2, 32, 16>}, {transform_indices = @transform_2, window_bounds = array<i64: 1, 2, 32, 16>}, {transform_indices = @transform_3, window_bounds = array<i64: 1, 2, 32, 16>}, {transform_indices = @transform_4, window_bounds = array<i64: 1, 2, 32, 16>}, {transform_indices = @transform_5, window_bounds = array<i64: 1, 2, 16, 32>}, {transform_indices = @transform_6, window_bounds = array<i64: 1, 1, 32>}, {transform_indices = @transform_7, window_bounds = array<i64: 1, 8, 32>}]} {
    %0 = arith.index_cast %arg0 : i32 to index
    %1 = memref.load %arg2[%0] : memref<2xi32, #tpu.memory_space<smem>>
    %2 = tpu.iota {dimensions = array<i32: 0>} : vector<8x8xi32>
    %3 = tpu.iota {dimensions = array<i32: 1>} : vector<8x8xi32>
    %4 = arith.cmpi sle, %3, %2 : vector<8x8xi32>
    %5 = vector.broadcast %1 : i32 to vector<8x8xi32>
    %6 = arith.cmpi slt, %3, %5 : vector<8x8xi32>
    %7 = arith.andi %4, %6 : vector<8x8xi1>
    %8 = arith.extui %7 : vector<8x8xi1> to vector<8x8xi32>
    %9 = arith.sitofp %8 : vector<8x8xi32> to vector<8x8xf32>
    %10 = tpu.iota {dimensions = array<i32: 0>} : vector<8x1xi32>
    %11 = vector.broadcast %1 : i32 to vector<8x1xi32>
    %12 = arith.cmpi slt, %10, %11 : vector<8x1xi32>
    %13 = arith.extui %12 : vector<8x1xi1> to vector<8x1xi32>
    %14 = arith.sitofp %13 : vector<8x1xi32> to vector<8x1xf32>
    %c0_i32 = arith.constant 0 : i32
    %15 = arith.cmpi eq, %arg1, %c0_i32 : i32
    %16 = arith.extui %15 : i1 to i32
    %c0_i32_0 = arith.constant 0 : i32
    %17 = arith.cmpi ne, %16, %c0_i32_0 : i32
    scf.if %17 {
      %c0_86 = arith.constant 0 : index
      %c0_87 = arith.constant 0 : index
      %c0_88 = arith.constant 0 : index
      %195 = vector.load %arg3[%c0_86, %c0_87, %c0_88] : memref<1x8x32xf32, #tpu.memory_space<vmem>>, vector<1x8x32xf32>
      %196 = vector.shape_cast %195 : vector<1x8x32xf32> to vector<8x32xf32>
      %197 = vector.broadcast %14 : vector<8x1xf32> to vector<8x32xf32>
      %198 = arith.mulf %196, %197 : vector<8x32xf32>
      %c0_89 = arith.constant 0 : index
      %c0_90 = arith.constant 0 : index
      %199 = vector.load %arg11[%c0_89, %c0_90] : memref<8x32xf32, #tpu.memory_space<vmem>>, vector<8x32xf32>
      tpu.vector_store %arg11[%c0_89, %c0_90], %198 {strides = array<i32>} : memref<8x32xf32, #tpu.memory_space<vmem>>, vector<8x32xf32>,
    } else {
    }
    %c0 = arith.constant 0 : index
    %c0_1 = arith.constant 0 : index
    %18 = vector.load %arg11[%c0, %c0_1] : memref<8x32xf32, #tpu.memory_space<vmem>>, vector<8x32xf32>
    %cst = arith.constant dense<0.000000e+00> : vector<8xf32>
    %19 = vector.multi_reduction <add>, %18, %cst [1] : vector<8x32xf32> to vector<8xf32>
    %20 = vector.shape_cast %19 : vector<8xf32> to vector<8x1xf32>
    %cst_2 = arith.constant 3.200000e+01 : f32
    %21 = vector.broadcast %cst_2 : f32 to vector<8x1xf32>
    %22 = arith.divf %20, %21 : vector<8x1xf32>
    %23 = vector.broadcast %22 : vector<8x1xf32> to vector<8x32xf32>
    %24 = arith.subf %18, %23 : vector<8x32xf32>
    %25 = arith.mulf %24, %24 : vector<8x32xf32>
    %cst_3 = arith.constant dense<0.000000e+00> : vector<8xf32>
    %26 = vector.multi_reduction <add>, %25, %cst_3 [1] : vector<8x32xf32> to vector<8xf32>
    %27 = vector.shape_cast %26 : vector<8xf32> to vector<8x1xf32>
    %cst_4 = arith.constant 3.200000e+01 : f32
    %28 = vector.broadcast %cst_4 : f32 to vector<8x1xf32>
    %29 = arith.divf %27, %28 : vector<8x1xf32>
    %30 = vector.broadcast %22 : vector<8x1xf32> to vector<8x32xf32>
    %31 = arith.subf %18, %30 : vector<8x32xf32>
    %cst_5 = arith.constant 9.99999997E-7 : f32
    %32 = vector.broadcast %cst_5 : f32 to vector<8x1xf32>
    %33 = arith.addf %29, %32 : vector<8x1xf32>
    %34 = math.rsqrt %33 : vector<8x1xf32>
    %35 = vector.broadcast %34 : vector<8x1xf32> to vector<8x32xf32>
    %36 = arith.mulf %31, %35 : vector<8x32xf32>
    %37 = arith.truncf %36 : vector<8x32xf32> to vector<8x32xbf16>
    %c0_6 = arith.constant 0 : index
    %c0_7 = arith.constant 0 : index
    %c0_8 = arith.constant 0 : index
    %c0_9 = arith.constant 0 : index
    %38 = vector.load %arg4[%c0_6, %c0_7, %c0_8, %c0_9] : memref<1x2x32x16xbf16, #tpu.memory_space<vmem>>, vector<1x1x32x16xbf16>
    %39 = vector.shape_cast %38 : vector<1x1x32x16xbf16> to vector<32x16xbf16>
    %cst_10 = arith.constant dense<0.000000e+00> : vector<8x16xf32>
    %40 = tpu.matmul %37, %39, %cst_10 {dimension_numbers = #tpu.dot_dimension_numbers<[1], [0], [0], [1], [0, 0, 1, 1], [], []>} : vector<8x32xbf16>, vector<32x16xbf16>, vector<8x16xf32> -> vector<8x16xf32>
    %41 = arith.negf %40 : vector<8x16xf32>
    %42 = math.exp %41 : vector<8x16xf32>
    %cst_11 = arith.constant 1.000000e+00 : f32
    %43 = vector.broadcast %cst_11 : f32 to vector<8x16xf32>
    %44 = arith.addf %43, %42 : vector<8x16xf32>
    %45 = arith.divf %43, %44 : vector<8x16xf32>
    %46 = arith.mulf %40, %45 : vector<8x16xf32>
    %c0_12 = arith.constant 0 : index
    %c0_13 = arith.constant 0 : index
    %c0_14 = arith.constant 0 : index
    %c0_15 = arith.constant 0 : index
    %47 = vector.load %arg5[%c0_12, %c0_13, %c0_14, %c0_15] : memref<1x2x32x16xbf16, #tpu.memory_space<vmem>>, vector<1x1x32x16xbf16>
    %48 = vector.shape_cast %47 : vector<1x1x32x16xbf16> to vector<32x16xbf16>
    %cst_16 = arith.constant dense<0.000000e+00> : vector<8x16xf32>
    %49 = tpu.matmul %37, %48, %cst_16 {dimension_numbers = #tpu.dot_dimension_numbers<[1], [0], [0], [1], [0, 0, 1, 1], [], []>} : vector<8x32xbf16>, vector<32x16xbf16>, vector<8x16xf32> -> vector<8x16xf32>
    %50 = arith.negf %49 : vector<8x16xf32>
    %51 = math.exp %50 : vector<8x16xf32>
    %cst_17 = arith.constant 1.000000e+00 : f32
    %52 = vector.broadcast %cst_17 : f32 to vector<8x16xf32>
    %53 = arith.addf %52, %51 : vector<8x16xf32>
    %54 = arith.divf %52, %53 : vector<8x16xf32>
    %55 = arith.mulf %49, %54 : vector<8x16xf32>
    %c0_18 = arith.constant 0 : index
    %c0_19 = arith.constant 0 : index
    %c0_20 = arith.constant 0 : index
    %c0_21 = arith.constant 0 : index
    %56 = vector.load %arg6[%c0_18, %c0_19, %c0_20, %c0_21] : memref<1x2x32x16xbf16, #tpu.memory_space<vmem>>, vector<1x1x32x16xbf16>
    %57 = vector.shape_cast %56 : vector<1x1x32x16xbf16> to vector<32x16xbf16>
    %cst_22 = arith.constant dense<0.000000e+00> : vector<8x16xf32>
    %58 = tpu.matmul %37, %57, %cst_22 {dimension_numbers = #tpu.dot_dimension_numbers<[1], [0], [0], [1], [0, 0, 1, 1], [], []>} : vector<8x32xbf16>, vector<32x16xbf16>, vector<8x16xf32> -> vector<8x16xf32>
    %59 = arith.negf %58 : vector<8x16xf32>
    %60 = math.exp %59 : vector<8x16xf32>
    %cst_23 = arith.constant 1.000000e+00 : f32
    %61 = vector.broadcast %cst_23 : f32 to vector<8x16xf32>
    %62 = arith.addf %61, %60 : vector<8x16xf32>
    %63 = arith.divf %61, %62 : vector<8x16xf32>
    %64 = arith.mulf %58, %63 : vector<8x16xf32>
    %c0_24 = arith.constant 0 : index
    %c0_25 = arith.constant 0 : index
    %c0_26 = arith.constant 0 : index
    %c0_27 = arith.constant 0 : index
    %65 = vector.load %arg7[%c0_24, %c0_25, %c0_26, %c0_27] : memref<1x2x32x16xbf16, #tpu.memory_space<vmem>>, vector<1x1x32x16xbf16>
    %66 = vector.shape_cast %65 : vector<1x1x32x16xbf16> to vector<32x16xbf16>
    %cst_28 = arith.constant dense<0.000000e+00> : vector<8x16xf32>
    %67 = tpu.matmul %37, %66, %cst_28 {dimension_numbers = #tpu.dot_dimension_numbers<[1], [0], [0], [1], [0, 0, 1, 1], [], []>} : vector<8x32xbf16>, vector<32x16xbf16>, vector<8x16xf32> -> vector<8x16xf32>
    %68 = arith.negf %67 : vector<8x16xf32>
    %69 = math.exp %68 : vector<8x16xf32>
    %cst_29 = arith.constant 1.000000e+00 : f32
    %70 = vector.broadcast %cst_29 : f32 to vector<8x16xf32>
    %71 = arith.addf %70, %69 : vector<8x16xf32>
    %72 = arith.divf %70, %71 : vector<8x16xf32>
    %73 = arith.mulf %67, %72 : vector<8x16xf32>
    %74 = arith.truncf %64 : vector<8x16xf32> to vector<8x16xbf16>
    %75 = arith.truncf %73 : vector<8x16xf32> to vector<8x16xbf16>
    %cst_30 = arith.constant dense<0.000000e+00> : vector<8x8xf32>
    %76 = tpu.matmul %74, %75, %cst_30 {dimension_numbers = #tpu.dot_dimension_numbers<[1], [1], [0], [0], [0, 0, 1, 0], [], []>} : vector<8x16xbf16>, vector<8x16xbf16>, vector<8x8xf32> -> vector<8x8xf32>
    %77 = arith.negf %76 : vector<8x8xf32>
    %78 = math.exp %77 : vector<8x8xf32>
    %cst_31 = arith.constant 1.000000e+00 : f32
    %79 = vector.broadcast %cst_31 : f32 to vector<8x8xf32>
    %80 = arith.addf %79, %78 : vector<8x8xf32>
    %81 = arith.divf %79, %80 : vector<8x8xf32>
    %82 = arith.mulf %76, %81 : vector<8x8xf32>
    %cst_32 = arith.constant 1.250000e-01 : f32
    %83 = vector.broadcast %cst_32 : f32 to vector<8x8xf32>
    %84 = arith.mulf %82, %83 : vector<8x8xf32>
    %85 = arith.mulf %84, %9 : vector<8x8xf32>
    %86 = arith.truncf %85 : vector<8x8xf32> to vector<8x8xbf16>
    %87 = arith.truncf %55 : vector<8x16xf32> to vector<8x16xbf16>
    %cst_33 = arith.constant dense<0.000000e+00> : vector<8x16xf32>
    %88 = tpu.matmul %86, %87, %cst_33 {dimension_numbers = #tpu.dot_dimension_numbers<[1], [0], [0], [1], [0, 0, 1, 1], [], []>} : vector<8x8xbf16>, vector<8x16xbf16>, vector<8x16xf32> -> vector<8x16xf32>
    %c0_34 = arith.constant 0 : index
    %c1 = arith.constant 1 : index
    %c0_35 = arith.constant 0 : index
    %c0_36 = arith.constant 0 : index
    %89 = vector.load %arg4[%c0_34, %c1, %c0_35, %c0_36] : memref<1x2x32x16xbf16, #tpu.memory_space<vmem>>, vector<1x1x32x16xbf16>
    %90 = vector.shape_cast %89 : vector<1x1x32x16xbf16> to vector<32x16xbf16>
    %cst_37 = arith.constant dense<0.000000e+00> : vector<8x16xf32>
    %91 = tpu.matmul %37, %90, %cst_37 {dimension_numbers = #tpu.dot_dimension_numbers<[1], [0], [0], [1], [0, 0, 1, 1], [], []>} : vector<8x32xbf16>, vector<32x16xbf16>, vector<8x16xf32> -> vector<8x16xf32>
    %92 = arith.negf %91 : vector<8x16xf32>
    %93 = math.exp %92 : vector<8x16xf32>
    %cst_38 = arith.constant 1.000000e+00 : f32
    %94 = vector.broadcast %cst_38 : f32 to vector<8x16xf32>
    %95 = arith.addf %94, %93 : vector<8x16xf32>
    %96 = arith.divf %94, %95 : vector<8x16xf32>
    %97 = arith.mulf %91, %96 : vector<8x16xf32>
    %c0_39 = arith.constant 0 : index
    %c1_40 = arith.constant 1 : index
    %c0_41 = arith.constant 0 : index
    %c0_42 = arith.constant 0 : index
    %98 = vector.load %arg5[%c0_39, %c1_40, %c0_41, %c0_42] : memref<1x2x32x16xbf16, #tpu.memory_space<vmem>>, vector<1x1x32x16xbf16>
    %99 = vector.shape_cast %98 : vector<1x1x32x16xbf16> to vector<32x16xbf16>
    %cst_43 = arith.constant dense<0.000000e+00> : vector<8x16xf32>
    %100 = tpu.matmul %37, %99, %cst_43 {dimension_numbers = #tpu.dot_dimension_numbers<[1], [0], [0], [1], [0, 0, 1, 1], [], []>} : vector<8x32xbf16>, vector<32x16xbf16>, vector<8x16xf32> -> vector<8x16xf32>
    %101 = arith.negf %100 : vector<8x16xf32>
    %102 = math.exp %101 : vector<8x16xf32>
    %cst_44 = arith.constant 1.000000e+00 : f32
    %103 = vector.broadcast %cst_44 : f32 to vector<8x16xf32>
    %104 = arith.addf %103, %102 : vector<8x16xf32>
    %105 = arith.divf %103, %104 : vector<8x16xf32>
    %106 = arith.mulf %100, %105 : vector<8x16xf32>
    %c0_45 = arith.constant 0 : index
    %c1_46 = arith.constant 1 : index
    %c0_47 = arith.constant 0 : index
    %c0_48 = arith.constant 0 : index
    %107 = vector.load %arg6[%c0_45, %c1_46, %c0_47, %c0_48] : memref<1x2x32x16xbf16, #tpu.memory_space<vmem>>, vector<1x1x32x16xbf16>
    %108 = vector.shape_cast %107 : vector<1x1x32x16xbf16> to vector<32x16xbf16>
    %cst_49 = arith.constant dense<0.000000e+00> : vector<8x16xf32>
    %109 = tpu.matmul %37, %108, %cst_49 {dimension_numbers = #tpu.dot_dimension_numbers<[1], [0], [0], [1], [0, 0, 1, 1], [], []>} : vector<8x32xbf16>, vector<32x16xbf16>, vector<8x16xf32> -> vector<8x16xf32>
    %110 = arith.negf %109 : vector<8x16xf32>
    %111 = math.exp %110 : vector<8x16xf32>
    %cst_50 = arith.constant 1.000000e+00 : f32
    %112 = vector.broadcast %cst_50 : f32 to vector<8x16xf32>
    %113 = arith.addf %112, %111 : vector<8x16xf32>
    %114 = arith.divf %112, %113 : vector<8x16xf32>
    %115 = arith.mulf %109, %114 : vector<8x16xf32>
    %c0_51 = arith.constant 0 : index
    %c1_52 = arith.constant 1 : index
    %c0_53 = arith.constant 0 : index
    %c0_54 = arith.constant 0 : index
    %116 = vector.load %arg7[%c0_51, %c1_52, %c0_53, %c0_54] : memref<1x2x32x16xbf16, #tpu.memory_space<vmem>>, vector<1x1x32x16xbf16>
    %117 = vector.shape_cast %116 : vector<1x1x32x16xbf16> to vector<32x16xbf16>
    %cst_55 = arith.constant dense<0.000000e+00> : vector<8x16xf32>
    %118 = tpu.matmul %37, %117, %cst_55 {dimension_numbers = #tpu.dot_dimension_numbers<[1], [0], [0], [1], [0, 0, 1, 1], [], []>} : vector<8x32xbf16>, vector<32x16xbf16>, vector<8x16xf32> -> vector<8x16xf32>
    %119 = arith.negf %118 : vector<8x16xf32>
    %120 = math.exp %119 : vector<8x16xf32>
    %cst_56 = arith.constant 1.000000e+00 : f32
    %121 = vector.broadcast %cst_56 : f32 to vector<8x16xf32>
    %122 = arith.addf %121, %120 : vector<8x16xf32>
    %123 = arith.divf %121, %122 : vector<8x16xf32>
    %124 = arith.mulf %118, %123 : vector<8x16xf32>
    %125 = arith.truncf %115 : vector<8x16xf32> to vector<8x16xbf16>
    %126 = arith.truncf %124 : vector<8x16xf32> to vector<8x16xbf16>
    %cst_57 = arith.constant dense<0.000000e+00> : vector<8x8xf32>
    %127 = tpu.matmul %125, %126, %cst_57 {dimension_numbers = #tpu.dot_dimension_numbers<[1], [1], [0], [0], [0, 0, 1, 0], [], []>} : vector<8x16xbf16>, vector<8x16xbf16>, vector<8x8xf32> -> vector<8x8xf32>
    %128 = arith.negf %127 : vector<8x8xf32>
    %129 = math.exp %128 : vector<8x8xf32>
    %cst_58 = arith.constant 1.000000e+00 : f32
    %130 = vector.broadcast %cst_58 : f32 to vector<8x8xf32>
    %131 = arith.addf %130, %129 : vector<8x8xf32>
    %132 = arith.divf %130, %131 : vector<8x8xf32>
    %133 = arith.mulf %127, %132 : vector<8x8xf32>
    %cst_59 = arith.constant 1.250000e-01 : f32
    %134 = vector.broadcast %cst_59 : f32 to vector<8x8xf32>
    %135 = arith.mulf %133, %134 : vector<8x8xf32>
    %136 = arith.mulf %135, %9 : vector<8x8xf32>
    %137 = arith.truncf %136 : vector<8x8xf32> to vector<8x8xbf16>
    %138 = arith.truncf %106 : vector<8x16xf32> to vector<8x16xbf16>
    %cst_60 = arith.constant dense<0.000000e+00> : vector<8x16xf32>
    %139 = tpu.matmul %137, %138, %cst_60 {dimension_numbers = #tpu.dot_dimension_numbers<[1], [0], [0], [1], [0, 0, 1, 1], [], []>} : vector<8x8xbf16>, vector<8x16xbf16>, vector<8x16xf32> -> vector<8x16xf32>
    %cst_61 = arith.constant 0.000000e+00 : f32
    %140 = vector.broadcast %cst_61 : f32 to vector<8x1xf32>
    %cst_62 = arith.constant dense<0.000000e+00> : vector<8xf32>
    %141 = vector.multi_reduction <add>, %88, %cst_62 [1] : vector<8x16xf32> to vector<8xf32>
    %142 = vector.shape_cast %141 : vector<8xf32> to vector<8x1xf32>
    %143 = arith.addf %140, %142 : vector<8x1xf32>
    %cst_63 = arith.constant dense<0.000000e+00> : vector<8xf32>
    %144 = vector.multi_reduction <add>, %139, %cst_63 [1] : vector<8x16xf32> to vector<8xf32>
    %145 = vector.shape_cast %144 : vector<8xf32> to vector<8x1xf32>
    %146 = arith.addf %143, %145 : vector<8x1xf32>
    %cst_64 = arith.constant 3.125000e-02 : f32
    %147 = vector.broadcast %cst_64 : f32 to vector<8x1xf32>
    %148 = arith.mulf %146, %147 : vector<8x1xf32>
    %cst_65 = arith.constant 0.000000e+00 : f32
    %149 = vector.broadcast %cst_65 : f32 to vector<8x1xf32>
    %150 = vector.broadcast %148 : vector<8x1xf32> to vector<8x16xf32>
    %151 = arith.subf %88, %150 : vector<8x16xf32>
    %152 = arith.mulf %151, %151 : vector<8x16xf32>
    %cst_66 = arith.constant dense<0.000000e+00> : vector<8xf32>
    %153 = vector.multi_reduction <add>, %152, %cst_66 [1] : vector<8x16xf32> to vector<8xf32>
    %154 = vector.shape_cast %153 : vector<8xf32> to vector<8x1xf32>
    %155 = arith.addf %149, %154 : vector<8x1xf32>
    %156 = vector.broadcast %148 : vector<8x1xf32> to vector<8x16xf32>
    %157 = arith.subf %139, %156 : vector<8x16xf32>
    %158 = arith.mulf %157, %157 : vector<8x16xf32>
    %cst_67 = arith.constant dense<0.000000e+00> : vector<8xf32>
    %159 = vector.multi_reduction <add>, %158, %cst_67 [1] : vector<8x16xf32> to vector<8xf32>
    %160 = vector.shape_cast %159 : vector<8xf32> to vector<8x1xf32>
    %161 = arith.addf %155, %160 : vector<8x1xf32>
    %cst_68 = arith.constant 3.125000e-02 : f32
    %162 = vector.broadcast %cst_68 : f32 to vector<8x1xf32>
    %163 = arith.mulf %161, %162 : vector<8x1xf32>
    %cst_69 = arith.constant 9.99999997E-7 : f32
    %164 = vector.broadcast %cst_69 : f32 to vector<8x1xf32>
    %165 = arith.addf %163, %164 : vector<8x1xf32>
    %166 = math.rsqrt %165 : vector<8x1xf32>
    %c0_70 = arith.constant 0 : index
    %c0_71 = arith.constant 0 : index
    %c0_72 = arith.constant 0 : index
    %167 = vector.load %arg9[%c0_70, %c0_71, %c0_72] : memref<1x1x32xf32, #tpu.memory_space<vmem>>, vector<1x1x32xf32>
    %168 = vector.shape_cast %167 : vector<1x1x32xf32> to vector<1x32xf32>
    %169 = vector.broadcast %148 : vector<8x1xf32> to vector<8x16xf32>
    %170 = arith.subf %88, %169 : vector<8x16xf32>
    %171 = vector.broadcast %166 : vector<8x1xf32> to vector<8x16xf32>
    %172 = arith.mulf %170, %171 : vector<8x16xf32>
    %173 = arith.mulf %46, %172 : vector<8x16xf32>
    %174 = arith.truncf %173 : vector<8x16xf32> to vector<8x16xbf16>
    %c0_73 = arith.constant 0 : index
    %c0_74 = arith.constant 0 : index
    %c0_75 = arith.constant 0 : index
    %c0_76 = arith.constant 0 : index
    %175 = vector.load %arg8[%c0_73, %c0_74, %c0_75, %c0_76] : memref<1x2x16x32xbf16, #tpu.memory_space<vmem>>, vector<1x1x16x32xbf16>
    %176 = vector.shape_cast %175 : vector<1x1x16x32xbf16> to vector<16x32xbf16>
    %cst_77 = arith.constant dense<0.000000e+00> : vector<8x32xf32>
    %177 = tpu.matmul %174, %176, %cst_77 {dimension_numbers = #tpu.dot_dimension_numbers<[1], [0], [0], [1], [0, 0, 1, 1], [], []>} : vector<8x16xbf16>, vector<16x32xbf16>, vector<8x32xf32> -> vector<8x32xf32>
    %178 = vector.broadcast %168 : vector<1x32xf32> to vector<8x32xf32>
    %179 = arith.addf %178, %177 : vector<8x32xf32>
    %180 = vector.broadcast %148 : vector<8x1xf32> to vector<8x16xf32>
    %181 = arith.subf %139, %180 : vector<8x16xf32>
    %182 = vector.broadcast %166 : vector<8x1xf32> to vector<8x16xf32>
    %183 = arith.mulf %181, %182 : vector<8x16xf32>
    %184 = arith.mulf %97, %183 : vector<8x16xf32>
    %185 = arith.truncf %184 : vector<8x16xf32> to vector<8x16xbf16>
    %c0_78 = arith.constant 0 : index
    %c1_79 = arith.constant 1 : index
    %c0_80 = arith.constant 0 : index
    %c0_81 = arith.constant 0 : index
    %186 = vector.load %arg8[%c0_78, %c1_79, %c0_80, %c0_81] : memref<1x2x16x32xbf16, #tpu.memory_space<vmem>>, vector<1x1x16x32xbf16>
    %187 = vector.shape_cast %186 : vector<1x1x16x32xbf16> to vector<16x32xbf16>
    %cst_82 = arith.constant dense<0.000000e+00> : vector<8x32xf32>
    %188 = tpu.matmul %185, %187, %cst_82 {dimension_numbers = #tpu.dot_dimension_numbers<[1], [0], [0], [1], [0, 0, 1, 1], [], []>} : vector<8x16xbf16>, vector<16x32xbf16>, vector<8x32xf32> -> vector<8x32xf32>
    %189 = arith.addf %179, %188 : vector<8x32xf32>
    %190 = arith.addf %189, %18 : vector<8x32xf32>
    %c0_83 = arith.constant 0 : index
    %c0_84 = arith.constant 0 : index
    %191 = vector.load %arg11[%c0_83, %c0_84] : memref<8x32xf32, #tpu.memory_space<vmem>>, vector<8x32xf32>
    tpu.vector_store %arg11[%c0_83, %c0_84], %190 {strides = array<i32>} : memref<8x32xf32, #tpu.memory_space<vmem>>, vector<8x32xf32>,
    %c1_i32 = arith.constant 1 : i32
    %192 = arith.cmpi eq, %arg1, %c1_i32 : i32
    %193 = arith.extui %192 : i1 to i32
    %c0_i32_85 = arith.constant 0 : i32
    %194 = arith.cmpi ne, %193, %c0_i32_85 : i32
    scf.if %194 {
      %195 = vector.broadcast %14 : vector<8x1xf32> to vector<8x32xf32>
      %196 = arith.mulf %190, %195 : vector<8x32xf32>
      %c0_86 = arith.constant 0 : index
      %c0_87 = arith.constant 0 : index
      %c0_88 = arith.constant 0 : index
      %197 = vector.load %arg10[%c0_86, %c0_87, %c0_88] : memref<1x8x32xf32, #tpu.memory_space<vmem>>, vector<1x8x32xf32>
      %198 = vector.shape_cast %197 : vector<1x8x32xf32> to vector<8x32xf32>
      %199 = vector.shape_cast %196 : vector<8x32xf32> to vector<1x8x32xf32>
      tpu.vector_store %arg10[%c0_86, %c0_87, %c0_88], %199 {strides = array<i32>} : memref<1x8x32xf32, #tpu.memory_space<vmem>>, vector<1x8x32xf32>,
    } else {
    }
    return
  }
  func.func @transform_0(%arg0: i32, %arg1: i32, %arg2: memref<2xi32, #tpu.memory_space<smem>>) -> (i32, i32, i32) {
    %c0_i32 = arith.constant 0 : i32
    %c0_i32_0 = arith.constant 0 : i32
    %c0_i32_1 = arith.constant 0 : i32
    return %arg0, %c0_i32, %c0_i32_0 : i32, i32, i32
  }
  func.func @transform_1(%arg0: i32, %arg1: i32, %arg2: memref<2xi32, #tpu.memory_space<smem>>) -> (i32, i32, i32, i32) {
    %c0_i32 = arith.constant 0 : i32
    %c0_i32_0 = arith.constant 0 : i32
    %c0_i32_1 = arith.constant 0 : i32
    %c0_i32_2 = arith.constant 0 : i32
    return %arg1, %c0_i32, %c0_i32_0, %c0_i32_1 : i32, i32, i32, i32
  }
  func.func @transform_2(%arg0: i32, %arg1: i32, %arg2: memref<2xi32, #tpu.memory_space<smem>>) -> (i32, i32, i32, i32) {
    %c0_i32 = arith.constant 0 : i32
    %c0_i32_0 = arith.constant 0 : i32
    %c0_i32_1 = arith.constant 0 : i32
    %c0_i32_2 = arith.constant 0 : i32
    return %arg1, %c0_i32, %c0_i32_0, %c0_i32_1 : i32, i32, i32, i32
  }
  func.func @transform_3(%arg0: i32, %arg1: i32, %arg2: memref<2xi32, #tpu.memory_space<smem>>) -> (i32, i32, i32, i32) {
    %c0_i32 = arith.constant 0 : i32
    %c0_i32_0 = arith.constant 0 : i32
    %c0_i32_1 = arith.constant 0 : i32
    %c0_i32_2 = arith.constant 0 : i32
    return %arg1, %c0_i32, %c0_i32_0, %c0_i32_1 : i32, i32, i32, i32
  }
  func.func @transform_4(%arg0: i32, %arg1: i32, %arg2: memref<2xi32, #tpu.memory_space<smem>>) -> (i32, i32, i32, i32) {
    %c0_i32 = arith.constant 0 : i32
    %c0_i32_0 = arith.constant 0 : i32
    %c0_i32_1 = arith.constant 0 : i32
    %c0_i32_2 = arith.constant 0 : i32
    return %arg1, %c0_i32, %c0_i32_0, %c0_i32_1 : i32, i32, i32, i32
  }
  func.func @transform_5(%arg0: i32, %arg1: i32, %arg2: memref<2xi32, #tpu.memory_space<smem>>) -> (i32, i32, i32, i32) {
    %c0_i32 = arith.constant 0 : i32
    %c0_i32_0 = arith.constant 0 : i32
    %c0_i32_1 = arith.constant 0 : i32
    %c0_i32_2 = arith.constant 0 : i32
    return %arg1, %c0_i32, %c0_i32_0, %c0_i32_1 : i32, i32, i32, i32
  }
  func.func @transform_6(%arg0: i32, %arg1: i32, %arg2: memref<2xi32, #tpu.memory_space<smem>>) -> (i32, i32, i32) {
    %c0_i32 = arith.constant 0 : i32
    %c0_i32_0 = arith.constant 0 : i32
    %c0_i32_1 = arith.constant 0 : i32
    return %arg1, %c0_i32, %c0_i32_0 : i32, i32, i32
  }
  func.func @transform_7(%arg0: i32, %arg1: i32, %arg2: memref<2xi32, #tpu.memory_space<smem>>) -> (i32, i32, i32) {
    %c0_i32 = arith.constant 0 : i32
    %c0_i32_0 = arith.constant 0 : i32
    %c0_i32_1 = arith.constant 0 : i32
    return %arg0, %c0_i32, %c0_i32_0 : i32, i32, i32
  }
}

</mosaic_0001>

<llo_original>
// kernel: tpu_custom_call.1
$region0: #{tpu_custom_call.1}
  #allocation0 [shape = 'u32[]', space=smem, size = 0x4, offset = 0x4, fixed_abs, tag = 'smem constant byte address 0x4 - core index']
  #allocation1 [shape = 'u32[72,128]{1,0:T(1,128)}', space=vmem, size = 0x9000, scoped, tag = 'internal scratch']
  #allocation2 [shape = 'f32[8,32]{1,0:T(8,128)}', space=vmem, size = 0x1000, scoped, tag = 'scratch operand']
  #allocation3 [shape = 's32[1]{0}', space=sflag, size = 0x4, scoped, tag = 'scoped memory for tpu_custom_call.1']
  #allocation4 [shape = 'u8[512]{0}', space=smem, size = 0x200, scoped, tag = 'prefetched SMEM operand 0']
  %s0 = inlined_call_operand.vmem [shape: s32[2], index: 0, kind: input, shape index: {}]
  %s1 = inlined_call_operand.vmem [shape: f32[2,8,32], index: 1, kind: input, shape index: {}]
  %s2 = inlined_call_operand.vmem [shape: bf16[2,2,32,16], index: 2, kind: input, shape index: {}]
  %s3 = inlined_call_operand.vmem [shape: bf16[2,2,32,16], index: 3, kind: input, shape index: {}]
  %s4 = inlined_call_operand.vmem [shape: bf16[2,2,32,16], index: 4, kind: input, shape index: {}]
  %s5 = inlined_call_operand.vmem [shape: bf16[2,2,32,16], index: 5, kind: input, shape index: {}]
  %s6 = inlined_call_operand.vmem [shape: bf16[2,2,16,32], index: 6, kind: input, shape index: {}]
  %s7 = inlined_call_operand.vmem [shape: f32[2,1,32], index: 7, kind: input, shape index: {}]
  %s8 = inlined_call_operand.hbm [shape: f32[2,8,32], index: 8, kind: output, shape index: {}]
  %s9 = sld [smem:[#allocation0]]
  $region69: #{tpu_custom_call.1} parent=0
    _
  %s11 = ssub.s32 1, %s9
  %s12 = scalar_select 0, %s11, %s9
  %s14 = sshll.u32 %s0, 4
  %s15 = int_to_ptr.vmem [resolvable:$true] %s14
  %17 = dma.vmem_to_smem %s15, 16, [#allocation4], [#allocation3]
  %19 = dma.done [#allocation3], 16
  %20 = sfence
  $region1: #{tpu_custom_call.1} parent=0
    #allocation5 [shape = 'u8[8192]{0}', space=vmem, size = 0x2000, scoped, tag = 'output window, operand 0']
    #allocation6 [shape = 's32[2]{0}', space=sflag, size = 0x8, scoped, tag = 'scoped memory for tpu_custom_call.1']
    %21 = vsyncpa [#allocation6], 0
    %s22 = scalar_lea.sflag [#allocation6], 1
    %23 = vsyncpa %s22, 0
    loop: start=0, step=1, limit=6
    $region2: #{tpu_custom_call.1} parent=1 // loop_pre_header
      _
    $region3: #{tpu_custom_call.1} parent=1 // loop_header
      %s25 = sphi 0, %s29
      %p26 = scmp.ge.s32.totalorder %s25, 6
      %s32 = sphi 0, %s44
      %s33 = sphi 0, %s40
      %s34 = sphi 0, %s32
      %s35 = sphi 0, %s33
      %s36 = sphi 0, %s34
      %s37 = sphi 0, %s35
      %s47 = sphi 0, %s49
      %s50 = sphi 0, %s47
      %s51 = sphi 0, %s50
      %s67 = sphi 0, %s51
      %s73 = sphi 0, %s75
      %s76 = sphi 0, %s73
      %s77 = sphi 0, %s76
      %s93 = sphi 0, %s77
      %s99 = sphi 0, %s101
      %s102 = sphi 0, %s99
      %s103 = sphi 0, %s102
      %s119 = sphi 0, %s103
      %s125 = sphi 0, %s127
      %s128 = sphi 0, %s125
      %s129 = sphi 0, %s128
      %s145 = sphi 0, %s129
      %s151 = sphi 0, %s153
      %s154 = sphi 0, %s151
      %s155 = sphi 0, %s154
      %s171 = sphi 0, %s155
      %s177 = sphi 0, %s179
      %s180 = sphi 0, %s177
      %s181 = sphi 0, %s180
      %s197 = sphi 0, %s181
      %s203 = sphi 0, %s205
      %s206 = sphi 0, %s203
      %s207 = sphi 0, %s206
      %s223 = sphi 0, %s207
      %s229 = sphi 0, %s231
      %s232 = sphi 0, %s229
      %s233 = sphi 0, %s232
      %s249 = sphi 0, %s233
    $region4: #{tpu_custom_call.1} parent=1 // loop_header_branch
      %28 = sbr.rel (%p26) target = $region8
    $region5: #{tpu_custom_call.1} parent=1 // loop_body
      %s30 = ssub.s32 %s25, 1
      %s31 = ssub.s32 %s25, 2
      %s38 = sadd.s32 1, %s33
      %p39 = scmp.ge.s32.totalorder %s38, 2
      %s40 = scalar_select %p39, 0, %s38
      %s41 = sadd.s32 1, %s32
      %s42 = scalar_select %p39, %s41, %s32
      %p43 = scmp.ge.s32.totalorder %s42, 2
      %s44 = scalar_select %p43, 0, %s42
      %s45 = ssub.s32 %s32, %s44
      %p46 = scmp.eq.s32.totalorder %s45, 0
      %s48 = sadd.s32 %s47, 1
      %s49 = scalar_select %p46, %s47, %s48
      %p52 = pneg %p46
      %p53 = scmp.eq.s32.totalorder %s25, 3
      %p54 = por %p52, %p53
      %p55 = scmp.ne.s32.totalorder %s47, %s50
      %p56 = scmp.eq.s32.totalorder %s25, 0
      %p57 = por %p55, %p56
      %p58 = scmp.ne.s32.totalorder %s47, %s50
      %p59 = scmp.eq.s32.totalorder %s30, 3
      %p60 = por %p58, %p59
      %p61 = scmp.ne.s32.totalorder %s50, %s51
      %p62 = scmp.eq.s32.totalorder %s30, 0
      %p63 = por %p61, %p62
      %p64 = scmp.ne.s32.totalorder %s50, %s51
      %p65 = scmp.eq.s32.totalorder %s31, 3
      %p66 = por %p64, %p65
      %p68 = scmp.ne.s32.totalorder %s51, %s67
      %p69 = scmp.eq.s32.totalorder %s31, 0
      %p70 = por %p68, %p69
      %s71 = ssub.s32 %s33, %s40
      %p72 = scmp.eq.s32.totalorder %s71, 0
      %s74 = sadd.s32 %s73, 1
      %s75 = scalar_select %p72, %s73, %s74
      %p78 = pneg %p72
      %p79 = scmp.eq.s32.totalorder %s25, 3
      %p80 = por %p78, %p79
      %p81 = scmp.ne.s32.totalorder %s73, %s76
      %p82 = scmp.eq.s32.totalorder %s25, 0
      %p83 = por %p81, %p82
      %p84 = scmp.ne.s32.totalorder %s73, %s76
      %p85 = scmp.eq.s32.totalorder %s30, 3
      %p86 = por %p84, %p85
      %p87 = scmp.ne.s32.totalorder %s76, %s77
      %p88 = scmp.eq.s32.totalorder %s30, 0
      %p89 = por %p87, %p88
      %p90 = scmp.ne.s32.totalorder %s76, %s77
      %p91 = scmp.eq.s32.totalorder %s31, 3
      %p92 = por %p90, %p91
      %p94 = scmp.ne.s32.totalorder %s77, %s93
      %p95 = scmp.eq.s32.totalorder %s31, 0
      %p96 = por %p94, %p95
      %s97 = ssub.s32 %s33, %s40
      %p98 = scmp.eq.s32.totalorder %s97, 0
      %s100 = sadd.s32 %s99, 1
      %s101 = scalar_select %p98, %s99, %s100
      %p104 = pneg %p98
      %p105 = scmp.eq.s32.totalorder %s25, 3
      %p106 = por %p104, %p105
      %p107 = scmp.ne.s32.totalorder %s99, %s102
      %p108 = scmp.eq.s32.totalorder %s25, 0
      %p109 = por %p107, %p108
      %p110 = scmp.ne.s32.totalorder %s99, %s102
      %p111 = scmp.eq.s32.totalorder %s30, 3
      %p112 = por %p110, %p111
      %p113 = scmp.ne.s32.totalorder %s102, %s103
      %p114 = scmp.eq.s32.totalorder %s30, 0
      %p115 = por %p113, %p114
      %p116 = scmp.ne.s32.totalorder %s102, %s103
      %p117 = scmp.eq.s32.totalorder %s31, 3
      %p118 = por %p116, %p117
      %p120 = scmp.ne.s32.totalorder %s103, %s119
      %p121 = scmp.eq.s32.totalorder %s31, 0
      %p122 = por %p120, %p121
      %s123 = ssub.s32 %s33, %s40
      %p124 = scmp.eq.s32.totalorder %s123, 0
      %s126 = sadd.s32 %s125, 1
      %s127 = scalar_select %p124, %s125, %s126
      %p130 = pneg %p124
      %p131 = scmp.eq.s32.totalorder %s25, 3
      %p132 = por %p130, %p131
      %p133 = scmp.ne.s32.totalorder %s125, %s128
      %p134 = scmp.eq.s32.totalorder %s25, 0
      %p135 = por %p133, %p134
      %p136 = scmp.ne.s32.totalorder %s125, %s128
      %p137 = scmp.eq.s32.totalorder %s30, 3
      %p138 = por %p136, %p137
      %p139 = scmp.ne.s32.totalorder %s128, %s129
      %p140 = scmp.eq.s32.totalorder %s30, 0
      %p141 = por %p139, %p140
      %p142 = scmp.ne.s32.totalorder %s128, %s129
      %p143 = scmp.eq.s32.totalorder %s31, 3
      %p144 = por %p142, %p143
      %p146 = scmp.ne.s32.totalorder %s129, %s145
      %p147 = scmp.eq.s32.totalorder %s31, 0
      %p148 = por %p146, %p147
      %s149 = ssub.s32 %s33, %s40
      %p150 = scmp.eq.s32.totalorder %s149, 0
      %s152 = sadd.s32 %s151, 1
      %s153 = scalar_select %p150, %s151, %s152
      %p156 = pneg %p150
      %p157 = scmp.eq.s32.totalorder %s25, 3
      %p158 = por %p156, %p157
      %p159 = scmp.ne.s32.totalorder %s151, %s154
      %p160 = scmp.eq.s32.totalorder %s25, 0
      %p161 = por %p159, %p160
      %p162 = scmp.ne.s32.totalorder %s151, %s154
      %p163 = scmp.eq.s32.totalorder %s30, 3
      %p164 = por %p162, %p163
      %p165 = scmp.ne.s32.totalorder %s154, %s155
      %p166 = scmp.eq.s32.totalorder %s30, 0
      %p167 = por %p165, %p166
      %p168 = scmp.ne.s32.totalorder %s154, %s155
      %p169 = scmp.eq.s32.totalorder %s31, 3
      %p170 = por %p168, %p169
      %p172 = scmp.ne.s32.totalorder %s155, %s171
      %p173 = scmp.eq.s32.totalorder %s31, 0
      %p174 = por %p172, %p173
      %s175 = ssub.s32 %s33, %s40
      %p176 = scmp.eq.s32.totalorder %s175, 0
      %s178 = sadd.s32 %s177, 1
      %s179 = scalar_select %p176, %s177, %s178
      %p182 = pneg %p176
      %p183 = scmp.eq.s32.totalorder %s25, 3
      %p184 = por %p182, %p183
      %p185 = scmp.ne.s32.totalorder %s177, %s180
      %p186 = scmp.eq.s32.totalorder %s25, 0
      %p187 = por %p185, %p186
      %p188 = scmp.ne.s32.totalorder %s177, %s180
      %p189 = scmp.eq.s32.totalorder %s30, 3
      %p190 = por %p188, %p189
      %p191 = scmp.ne.s32.totalorder %s180, %s181
      %p192 = scmp.eq.s32.totalorder %s30, 0
      %p193 = por %p191, %p192
      %p194 = scmp.ne.s32.totalorder %s180, %s181
      %p195 = scmp.eq.s32.totalorder %s31, 3
      %p196 = por %p194, %p195
      %p198 = scmp.ne.s32.totalorder %s181, %s197
      %p199 = scmp.eq.s32.totalorder %s31, 0
      %p200 = por %p198, %p199
      %s201 = ssub.s32 %s33, %s40
      %p202 = scmp.eq.s32.totalorder %s201, 0
      %s204 = sadd.s32 %s203, 1
      %s205 = scalar_select %p202, %s203, %s204
      %p208 = pneg %p202
      %p209 = scmp.eq.s32.totalorder %s25, 3
      %p210 = por %p208, %p209
      %p211 = scmp.ne.s32.totalorder %s203, %s206
      %p212 = scmp.eq.s32.totalorder %s25, 0
      %p213 = por %p211, %p212
      %p214 = scmp.ne.s32.totalorder %s203, %s206
      %p215 = scmp.eq.s32.totalorder %s30, 3
      %p216 = por %p214, %p215
      %p217 = scmp.ne.s32.totalorder %s206, %s207
      %p218 = scmp.eq.s32.totalorder %s30, 0
      %p219 = por %p217, %p218
      %p220 = scmp.ne.s32.totalorder %s206, %s207
      %p221 = scmp.eq.s32.totalorder %s31, 3
      %p222 = por %p220, %p221
      %p224 = scmp.ne.s32.totalorder %s207, %s223
      %p225 = scmp.eq.s32.totalorder %s31, 0
      %p226 = por %p224, %p225
      %s227 = ssub.s32 %s32, %s44
      %p228 = scmp.eq.s32.totalorder %s227, 0
      %s230 = sadd.s32 %s229, 1
      %s231 = scalar_select %p228, %s229, %s230
      %p234 = pneg %p228
      %p235 = scmp.eq.s32.totalorder %s25, 3
      %p236 = por %p234, %p235
      %p237 = scmp.ne.s32.totalorder %s229, %s232
      %p238 = scmp.eq.s32.totalorder %s25, 0
      %p239 = por %p237, %p238
      %p240 = scmp.ne.s32.totalorder %s229, %s232
      %p241 = scmp.eq.s32.totalorder %s30, 3
      %p242 = por %p240, %p241
      %p243 = scmp.ne.s32.totalorder %s232, %s233
      %p244 = scmp.eq.s32.totalorder %s30, 0
      %p245 = por %p243, %p244
      %p246 = scmp.ne.s32.totalorder %s232, %s233
      %p247 = scmp.eq.s32.totalorder %s31, 3
      %p248 = por %p246, %p247
      %p250 = scmp.ne.s32.totalorder %s233, %s249
      %p251 = scmp.eq.s32.totalorder %s31, 0
      %p252 = por %p250, %p251
      %p253 = scmp.le.s32.totalorder 1, %s25
      %p254 = scmp.lt.s32.totalorder %s25, 5
      %p255 = pnand %p253, %p254
      %p256 = pneg %p255
      // Predicated region
      $region9: #{tpu_custom_call.1} parent=5 // pred_check
        _
      $region10: #{tpu_custom_call.1} parent=5 // pred_check_branch
        %258 = sbr.rel (%p255) target = $region12
      $region11: #{tpu_custom_call.1} parent=5 // pred_region
        %s259 = ssub.s32 %s25, 1
      $region12: #{tpu_custom_call.1} parent=5 // pred_fallthru
        _
      %p260 = scmp.lt.s32.totalorder %s25, 4
      // Predicated region
      $region13: #{tpu_custom_call.1} parent=5 // pred_check
        %p261 = pneg %p260
      $region14: #{tpu_custom_call.1} parent=5 // pred_check_branch
        %263 = sbr.rel (%p261) target = $region16
      $region15: #{tpu_custom_call.1} parent=5 // pred_region
        // Predicated region
        $region17: #{tpu_custom_call.1} parent=15 // pred_check
          %p264 = pneg %p57
        $region18: #{tpu_custom_call.1} parent=15 // pred_check_branch
          %266 = sbr.rel (%p264) target = $region20
        $region19: #{tpu_custom_call.1} parent=15 // pred_region
          %p267 = scmp.lt.s32.totalorder %s32, 1
          %s268 = scalar_select %p267, %s32, 1
          %s269 = smul.addr %s268, 8
          %s270 = scalar_lea.vmem %s1, %s269
        $region20: #{tpu_custom_call.1} parent=15 // pred_fallthru
          _
        // Predicated region
        $region21: #{tpu_custom_call.1} parent=15 // pred_check
          %p271 = pneg %p83
        $region22: #{tpu_custom_call.1} parent=15 // pred_check_branch
          %273 = sbr.rel (%p271) target = $region24
        $region23: #{tpu_custom_call.1} parent=15 // pred_region
          %p274 = scmp.lt.s32.totalorder %s33, 1
          %s275 = scalar_select %p274, %s33, 1
          %s276 = smul.addr %s275, 8
          %s277 = smul.addr %s276, 4
          %s278 = scalar_lea.vmem %s2, %s277
        $region24: #{tpu_custom_call.1} parent=15 // pred_fallthru
          _
        // Predicated region
        $region25: #{tpu_custom_call.1} parent=15 // pred_check
          %p279 = pneg %p109
        $region26: #{tpu_custom_call.1} parent=15 // pred_check_branch
          %281 = sbr.rel (%p279) target = $region28
        $region27: #{tpu_custom_call.1} parent=15 // pred_region
          %p282 = scmp.lt.s32.totalorder %s33, 1
          %s283 = scalar_select %p282, %s33, 1
          %s284 = smul.addr %s283, 8
          %s285 = smul.addr %s284, 4
          %s286 = scalar_lea.vmem %s3, %s285
        $region28: #{tpu_custom_call.1} parent=15 // pred_fallthru
          _
        // Predicated region
        $region29: #{tpu_custom_call.1} parent=15 // pred_check
          %p287 = pneg %p135
        $region30: #{tpu_custom_call.1} parent=15 // pred_check_branch
          %289 = sbr.rel (%p287) target = $region32
        $region31: #{tpu_custom_call.1} parent=15 // pred_region
          %p290 = scmp.lt.s32.totalorder %s33, 1
          %s291 = scalar_select %p290, %s33, 1
          %s292 = smul.addr %s291, 8
          %s293 = smul.addr %s292, 4
          %s294 = scalar_lea.vmem %s4, %s293
        $region32: #{tpu_custom_call.1} parent=15 // pred_fallthru
          _
        // Predicated region
        $region33: #{tpu_custom_call.1} parent=15 // pred_check
          %p295 = pneg %p161
        $region34: #{tpu_custom_call.1} parent=15 // pred_check_branch
          %297 = sbr.rel (%p295) target = $region36
        $region35: #{tpu_custom_call.1} parent=15 // pred_region
          %p298 = scmp.lt.s32.totalorder %s33, 1
          %s299 = scalar_select %p298, %s33, 1
          %s300 = smul.addr %s299, 8
          %s301 = smul.addr %s300, 4
          %s302 = scalar_lea.vmem %s5, %s301
        $region36: #{tpu_custom_call.1} parent=15 // pred_fallthru
          _
        // Predicated region
        $region37: #{tpu_custom_call.1} parent=15 // pred_check
          %p303 = pneg %p187
        $region38: #{tpu_custom_call.1} parent=15 // pred_check_branch
          %305 = sbr.rel (%p303) target = $region40
        $region39: #{tpu_custom_call.1} parent=15 // pred_region
          %p306 = scmp.lt.s32.totalorder %s33, 1
          %s307 = scalar_select %p306, %s33, 1
          %s308 = smul.addr %s307, 4
          %s309 = smul.addr %s308, 4
          %s310 = scalar_lea.vmem %s6, %s309
        $region40: #{tpu_custom_call.1} parent=15 // pred_fallthru
          _
        // Predicated region
        $region41: #{tpu_custom_call.1} parent=15 // pred_check
          %p311 = pneg %p213
        $region42: #{tpu_custom_call.1} parent=15 // pred_check_branch
          %313 = sbr.rel (%p311) target = $region44
        $region43: #{tpu_custom_call.1} parent=15 // pred_region
          %p314 = scmp.lt.s32.totalorder %s33, 1
          %s315 = scalar_select %p314, %s33, 1
          %s316 = scalar_lea.vmem %s7, %s315
        $region44: #{tpu_custom_call.1} parent=15 // pred_fallthru
          _
      $region16: #{tpu_custom_call.1} parent=5 // pred_fallthru
        _
      %p317 = scmp.le.s32.totalorder 1, %s25
      %p318 = scmp.lt.s32.totalorder %s25, 5
      %p319 = pnand %p317, %p318
      %p320 = pneg %p319
      // Predicated region
      $region45: #{tpu_custom_call.1} parent=5 // pred_check
        _
      $region46: #{tpu_custom_call.1} parent=5 // pred_check_branch
        %322 = sbr.rel (%p319) target = $region48
      $region47: #{tpu_custom_call.1} parent=5 // pred_region
        %s323 = ssub.s32 %s25, 1
        %p324 = scmp.lt.s32.totalorder %s34, 1
        %s325 = scalar_select %p324, %s34, 1
        %s326 = smul.addr %s325, 8
        %s327 = scalar_lea.vmem %s1, %s326
        %p328 = pneg %p63
        %p329 = pneg %p60
        %p330 = scmp.lt.s32.totalorder %s35, 1
        %s331 = scalar_select %p330, %s35, 1
        %s332 = smul.addr %s331, 8
        %s333 = smul.addr %s332, 4
        %s334 = scalar_lea.vmem %s2, %s333
        %p335 = pneg %p89
        %p336 = pneg %p86
        %p337 = scmp.lt.s32.totalorder %s35, 1
        %s338 = scalar_select %p337, %s35, 1
        %s339 = smul.addr %s338, 8
        %s340 = smul.addr %s339, 4
        %s341 = scalar_lea.vmem %s3, %s340
        %p342 = pneg %p115
        %p343 = pneg %p112
        %p344 = scmp.lt.s32.totalorder %s35, 1
        %s345 = scalar_select %p344, %s35, 1
        %s346 = smul.addr %s345, 8
        %s347 = smul.addr %s346, 4
        %s348 = scalar_lea.vmem %s4, %s347
        %p349 = pneg %p141
        %p350 = pneg %p138
        %p351 = scmp.lt.s32.totalorder %s35, 1
        %s352 = scalar_select %p351, %s35, 1
        %s353 = smul.addr %s352, 8
        %s354 = smul.addr %s353, 4
        %s355 = scalar_lea.vmem %s5, %s354
        %p356 = pneg %p167
        %p357 = pneg %p164
        %p358 = scmp.lt.s32.totalorder %s35, 1
        %s359 = scalar_select %p358, %s35, 1
        %s360 = smul.addr %s359, 4
        %s361 = smul.addr %s360, 4
        %s362 = scalar_lea.vmem %s6, %s361
        %p363 = pneg %p193
        %p364 = pneg %p190
        %p365 = scmp.lt.s32.totalorder %s35, 1
        %s366 = scalar_select %p365, %s35, 1
        %s367 = scalar_lea.vmem %s7, %s366
        %p368 = pneg %p219
        %p369 = pneg %p216
        %p370 = pneg %p245
        %p371 = pneg %p242
        %s372 = sand.u32 %s232, 1
        %s373 = scalar_lea.sflag [#allocation6], %s372
        %s374 = sand.u32 %s232, 1
        %s375 = smul.addr %s374, 8
        %s376 = scalar_lea.vmem [#allocation5], %s375
        %p377 = scmp.lt.s32.totalorder %s34, 1
        %s378 = scalar_select %p377, %s34, 1
        %s379 = smul.addr %s378, 8
        %s380 = scalar_lea.vmem %s1, %s379
        %p381 = scmp.lt.s32.totalorder %s35, 1
        %s382 = scalar_select %p381, %s35, 1
        %s383 = smul.addr %s382, 8
        %s384 = smul.addr %s383, 4
        %s385 = scalar_lea.vmem %s2, %s384
        %p386 = scmp.lt.s32.totalorder %s35, 1
        %s387 = scalar_select %p386, %s35, 1
        %s388 = smul.addr %s387, 8
        %s389 = smul.addr %s388, 4
        %s390 = scalar_lea.vmem %s3, %s389
        %p391 = scmp.lt.s32.totalorder %s35, 1
        %s392 = scalar_select %p391, %s35, 1
        %s393 = smul.addr %s392, 8
        %s394 = smul.addr %s393, 4
        %s395 = scalar_lea.vmem %s4, %s394
        %p396 = scmp.lt.s32.totalorder %s35, 1
        %s397 = scalar_select %p396, %s35, 1
        %s398 = smul.addr %s397, 8
        %s399 = smul.addr %s398, 4
        %s400 = scalar_lea.vmem %s5, %s399
        %p401 = scmp.lt.s32.totalorder %s35, 1
        %s402 = scalar_select %p401, %s35, 1
        %s403 = smul.addr %s402, 4
        %s404 = smul.addr %s403, 4
        %s405 = scalar_lea.vmem %s6, %s404
        %p406 = scmp.lt.s32.totalorder %s35, 1
        %s407 = scalar_select %p406, %s35, 1
        %s408 = scalar_lea.vmem %s7, %s407
        %s410 = sld [smem:[#allocation4 + %s34]]
        %v411 = vlaneseq
        %v412 = vshrl.u32 %v411, 7
        %v413 = vlaneseq
        %v414 = vand.u32 %v413, 127
        %vm415 = vcmp.le.s32.totalorder %v414, %v412
        %v416 = vstv %s410
        %vm417 = vcmp.lt.s32.totalorder %v414, %v416
        %vm418 = vmand %vm415, %vm417
        %v419 = vsel %vm418, 1, 0
        %v420 = vcvt.s32.f32 %v419
        %vm421 = vcmp.lt.s32.totalorder %v412, %v416
        %v422 = vsel %vm421, 1, 0
        %v423 = vcvt.s32.f32 %v422
        %p424 = scmp.eq.s32.totalorder %s35, 0
        // Predicated region
        $region49: #{tpu_custom_call.1} parent=47 // pred_check
          %p425 = pneg %p424
        $region50: #{tpu_custom_call.1} parent=47 // pred_check_branch
          %427 = sbr.rel (%p425) target = $region52
        $region51: #{tpu_custom_call.1} parent=47 // pred_region
          %v428 = vld [vmem:[%s380] sm:$0xff]
          %v429 = vmul.f32 %v428, %v423
          %vm430 = vcmask 261120
          %431 = vst.msk [vmem:[#allocation2] sm:$0xff] %vm430, %v429
        $region52: #{tpu_custom_call.1} parent=47 // pred_fallthru
          _
        %v432 = vld [vmem:[#allocation2] sm:$0xff]
        %vm433 = vcmask 261120
        %v434 = vsel %vm433, %v432, 0.0
        %435 = vadd.xlane.f32.xlu0 %v434
        %v436 = vpop.xlane.xlu0 %435
        %v437 = vrcp.pop 32.0
        %v438 = vmul.f32 32.0, %v437
        %v439 = vsub.f32 1.0, %v438
        %v440 = vmul.f32 %v437, %v439
        %v441 = vadd.f32 %v437, %v440
        %vm442 = vweird.f32 %v437
        %v443 = vsel %vm442, %v437, %v441
        %v444 = vmul.f32 %v436, %v443
        %v445 = vsub.f32 %v432, %v444
        %v446 = vmul.f32 %v445, %v445
        %v447 = vsel %vm433, %v446, 0.0
        %448 = vadd.xlane.f32.xlu0 %v447
        %v449 = vpop.xlane.xlu0 %448
        %v450 = vmul.f32 %v449, %v443
        %v451 = vadd.f32 %v450, 1e-06
        %v452 = vrsqrt.pop %v451
        %v453 = vmul.f32 %v452, %v451
        %v454 = vmul.f32 %v453, %v452
        %v455 = vmul.f32 0.5, %v454
        %v456 = vsub.f32 1.5, %v455
        %v457 = vmul.f32 %v452, %v456
        %vm458 = vweird.f32 %v451
        %vm459 = vweird.f32 %v452
        %vm460 = vmor %vm458, %vm459
        %v461 = vsel %vm460, %v452, %v457
        %v462 = vmul.f32 %v445, %v461
        %v463 = vpack.c.bf16 %v462, %v462
        %v464 = vld [vmem:[%s385] sm:$0xf]
        %v465 = vld [vmem:[%s385 + $0x4] sm:$0xf]
        %v466 = vld [vmem:[%s385 + $0x8] sm:$0xf]
        %v467 = vld [vmem:[%s385 + $0xc] sm:$0xf]
        %v472 = vunpack.c.l.b16 %v464
        %v473 = vunpack.c.l.b16 %v465
        %v474 = vunpack.c.l.b16 %v466
        %v475 = vunpack.c.l.b16 %v467
        %v476 = vpack.c.b16 %v473, %v472
        %v477 = vpack.c.b16 %v475, %v474
        %v481 = vsel %vm433, %v463, 0
        %483 = vmatpush.bf16.msra.mxu0 0
        %484 = vmatpush.bf16.msra.mxu0 0
        %485 = vmatpush.bf16.msra.mxu0 0
        %486 = vmatpush.bf16.msra.mxu0 0
        %487 = vmatpush.bf16.msra.mxu0 0
        %488 = vmatpush.bf16.msra.mxu0 0
        %489 = vmatpush.bf16.msra.mxu0 %v477
        %490 = vmatpush.bf16.msra.mxu0 %v476
        %491 = vmatmul.bf16.gmra.mxu0 %v481
        %v492 = vpop.f32.mrf.mxu0
        %v493 = vadd.f32 0.0, %v492
        %v494 = vpop.f32.mrf.mxu0
        %495 = vdwg.mxu0
        %v496 = vxor.u32 %v493, 2147483648
        %v497 = vmul.f32 %v496, 1.442695
        %v498 = vpow.pop %v497
        %v499 = vadd.f32 %v498, 1.0
        %v500 = vrcp.pop %v499
        %v501 = vmul.f32 %v499, %v500
        %v502 = vsub.f32 1.0, %v501
        %v503 = vmul.f32 %v500, %v502
        %v504 = vadd.f32 %v500, %v503
        %vm505 = vweird.f32 %v499
        %vm506 = vweird.f32 %v500
        %vm507 = vmor %vm505, %vm506
        %v508 = vsel %vm507, %v500, %v504
        %v509 = vand.u32 2147483647, %v499
        %vm510 = vcmp.eq.f32.partialorder %v509, 8.507059e+37
        %v511 = vand.u32 %v499, 2147483648
        %v512 = vor.u32 1.1754944e-38, %v511
        %v513 = vsel %vm510, %v512, %v508
        %v514 = vmul.f32 1.0, %v513
        %v515 = vmul.f32 %v493, %v514
        %v516 = vld [vmem:[%s390] sm:$0xf]
        %v517 = vld [vmem:[%s390 + $0x4] sm:$0xf]
        %v518 = vld [vmem:[%s390 + $0x8] sm:$0xf]
        %v519 = vld [vmem:[%s390 + $0xc] sm:$0xf]
        %v524 = vunpack.c.l.b16 %v516
        %v525 = vunpack.c.l.b16 %v517
        %v526 = vunpack.c.l.b16 %v518
        %v527 = vunpack.c.l.b16 %v519
        %v528 = vpack.c.b16 %v525, %v524
        %v529 = vpack.c.b16 %v527, %v526
        %532 = vmatpush.bf16.msra.mxu0 0
        %533 = vmatpush.bf16.msra.mxu0 0
        %534 = vmatpush.bf16.msra.mxu0 0
        %535 = vmatpush.bf16.msra.mxu0 0
        %536 = vmatpush.bf16.msra.mxu0 0
        %537 = vmatpush.bf16.msra.mxu0 0
        %538 = vmatpush.bf16.msra.mxu0 %v529
        %539 = vmatpush.bf16.msra.mxu0 %v528
        %540 = vmatmul.bf16.gmra.mxu0 %v481
        %v541 = vpop.f32.mrf.mxu0
        %v542 = vadd.f32 0.0, %v541
        %v543 = vpop.f32.mrf.mxu0
        %544 = vdwg.mxu0
        %v545 = vxor.u32 %v542, 2147483648
        %v546 = vmul.f32 %v545, 1.442695
        %v547 = vpow.pop %v546
        %v548 = vadd.f32 %v547, 1.0
        %v549 = vrcp.pop %v548
        %v550 = vmul.f32 %v548, %v549
        %v551 = vsub.f32 1.0, %v550
        %v552 = vmul.f32 %v549, %v551
        %v553 = vadd.f32 %v549, %v552
        %vm554 = vweird.f32 %v548
        %vm555 = vweird.f32 %v549
        %vm556 = vmor %vm554, %vm555
        %v557 = vsel %vm556, %v549, %v553
        %v558 = vand.u32 2147483647, %v548
        %vm559 = vcmp.eq.f32.partialorder %v558, 8.507059e+37
        %v560 = vand.u32 %v548, 2147483648
        %v561 = vor.u32 1.1754944e-38, %v560
        %v562 = vsel %vm559, %v561, %v557
        %v563 = vmul.f32 1.0, %v562
        %v564 = vmul.f32 %v542, %v563
        %v565 = vld [vmem:[%s395] sm:$0xf]
        %v566 = vld [vmem:[%s395 + $0x4] sm:$0xf]
        %v567 = vld [vmem:[%s395 + $0x8] sm:$0xf]
        %v568 = vld [vmem:[%s395 + $0xc] sm:$0xf]
        %v573 = vunpack.c.l.b16 %v565
        %v574 = vunpack.c.l.b16 %v566
        %v575 = vunpack.c.l.b16 %v567
        %v576 = vunpack.c.l.b16 %v568
        %v577 = vpack.c.b16 %v574, %v573
        %v578 = vpack.c.b16 %v576, %v575
        %581 = vmatpush.bf16.msra.mxu0 0
        %582 = vmatpush.bf16.msra.mxu0 0
        %583 = vmatpush.bf16.msra.mxu0 0
        %584 = vmatpush.bf16.msra.mxu0 0
        %585 = vmatpush.bf16.msra.mxu0 0
        %586 = vmatpush.bf16.msra.mxu0 0
        %587 = vmatpush.bf16.msra.mxu0 %v578
        %588 = vmatpush.bf16.msra.mxu0 %v577
        %589 = vmatmul.bf16.gmra.mxu0 %v481
        %v590 = vpop.f32.mrf.mxu0
        %v591 = vadd.f32 0.0, %v590
        %v592 = vpop.f32.mrf.mxu0
        %593 = vdwg.mxu0
        %v594 = vxor.u32 %v591, 2147483648
        %v595 = vmul.f32 %v594, 1.442695
        %v596 = vpow.pop %v595
        %v597 = vadd.f32 %v596, 1.0
        %v598 = vrcp.pop %v597
        %v599 = vmul.f32 %v597, %v598
        %v600 = vsub.f32 1.0, %v599
        %v601 = vmul.f32 %v598, %v600
        %v602 = vadd.f32 %v598, %v601
        %vm603 = vweird.f32 %v597
        %vm604 = vweird.f32 %v598
        %vm605 = vmor %vm603, %vm604
        %v606 = vsel %vm605, %v598, %v602
        %v607 = vand.u32 2147483647, %v597
        %vm608 = vcmp.eq.f32.partialorder %v607, 8.507059e+37
        %v609 = vand.u32 %v597, 2147483648
        %v610 = vor.u32 1.1754944e-38, %v609
        %v611 = vsel %vm608, %v610, %v606
        %v612 = vmul.f32 1.0, %v611
        %v613 = vmul.f32 %v591, %v612
        %v614 = vld [vmem:[%s400] sm:$0xf]
        %v615 = vld [vmem:[%s400 + $0x4] sm:$0xf]
        %v616 = vld [vmem:[%s400 + $0x8] sm:$0xf]
        %v617 = vld [vmem:[%s400 + $0xc] sm:$0xf]
        %v622 = vunpack.c.l.b16 %v614
        %v623 = vunpack.c.l.b16 %v615
        %v624 = vunpack.c.l.b16 %v616
        %v625 = vunpack.c.l.b16 %v617
        %v626 = vpack.c.b16 %v623, %v622
        %v627 = vpack.c.b16 %v625, %v624
        %630 = vmatpush.bf16.msra.mxu0 0
        %631 = vmatpush.bf16.msra.mxu0 0
        %632 = vmatpush.bf16.msra.mxu0 0
        %633 = vmatpush.bf16.msra.mxu0 0
        %634 = vmatpush.bf16.msra.mxu0 0
        %635 = vmatpush.bf16.msra.mxu0 0
        %636 = vmatpush.bf16.msra.mxu0 %v627
        %637 = vmatpush.bf16.msra.mxu0 %v626
        %638 = vmatmul.bf16.gmra.mxu0 %v481
        %v639 = vpop.f32.mrf.mxu0
        %v640 = vadd.f32 0.0, %v639
        %v641 = vpop.f32.mrf.mxu0
        %642 = vdwg.mxu0
        %v643 = vxor.u32 %v640, 2147483648
        %v644 = vmul.f32 %v643, 1.442695
        %v645 = vpow.pop %v644
        %v646 = vadd.f32 %v645, 1.0
        %v647 = vrcp.pop %v646
        %v648 = vmul.f32 %v646, %v647
        %v649 = vsub.f32 1.0, %v648
        %v650 = vmul.f32 %v647, %v649
        %v651 = vadd.f32 %v647, %v650
        %vm652 = vweird.f32 %v646
        %vm653 = vweird.f32 %v647
        %vm654 = vmor %vm652, %vm653
        %v655 = vsel %vm654, %v647, %v651
        %v656 = vand.u32 2147483647, %v646
        %vm657 = vcmp.eq.f32.partialorder %v656, 8.507059e+37
        %v658 = vand.u32 %v646, 2147483648
        %v659 = vor.u32 1.1754944e-38, %v658
        %v660 = vsel %vm657, %v659, %v655
        %v661 = vmul.f32 1.0, %v660
        %v662 = vmul.f32 %v640, %v661
        %v663 = vpack.c.bf16 %v613, %v613
        %v664 = vpack.c.bf16 %v662, %v662
        %vm665 = vcmask 130048
        %v667 = vsel %vm665, %v663, 0
        %v670 = vsel %vm665, %v664, 0
        %672 = vmatpush.bf16.xpose.msra.mxu0 0
        %673 = vmatpush.bf16.xpose.msra.mxu0 0
        %674 = vmatpush.bf16.xpose.msra.mxu0 0
        %675 = vmatpush.bf16.xpose.msra.mxu0 0
        %676 = vmatpush.bf16.xpose.msra.mxu0 0
        %677 = vmatpush.bf16.xpose.msra.mxu0 0
        %678 = vmatpush.bf16.xpose.msra.mxu0 0
        %679 = vmatpush.bf16.xpose.msra.mxu0 %v670
        %680 = vmatmul.bf16.gmra.mxu0 %v667
        %v681 = vpop.f32.mrf.mxu0
        %v682 = vadd.f32 0.0, %v681
        %v683 = vpop.f32.mrf.mxu0
        %684 = vdwg.mxu0
        %v685 = vxor.u32 %v682, 2147483648
        %v686 = vmul.f32 %v685, 1.442695
        %v687 = vpow.pop %v686
        %v688 = vadd.f32 %v687, 1.0
        %v689 = vrcp.pop %v688
        %v690 = vmul.f32 %v688, %v689
        %v691 = vsub.f32 1.0, %v690
        %v692 = vmul.f32 %v689, %v691
        %v693 = vadd.f32 %v689, %v692
        %vm694 = vweird.f32 %v688
        %vm695 = vweird.f32 %v689
        %vm696 = vmor %vm694, %vm695
        %v697 = vsel %vm696, %v689, %v693
        %v698 = vand.u32 2147483647, %v688
        %vm699 = vcmp.eq.f32.partialorder %v698, 8.507059e+37
        %v700 = vand.u32 %v688, 2147483648
        %v701 = vor.u32 1.1754944e-38, %v700
        %v702 = vsel %vm699, %v701, %v697
        %v703 = vmul.f32 1.0, %v702
        %v704 = vmul.f32 %v682, %v703
        %v705 = vmul.f32 %v704, 0.125
        %v706 = vmul.f32 %v705, %v420
        %v707 = vpack.c.bf16 %v706, %v706
        %v708 = vpack.c.bf16 %v564, %v564
        %vm709 = vcmask 64512
        %v711 = vsel %vm709, %v707, 0
        %vm713 = vcmask 1043456
        %v715 = vsel %vm713, %v708, 0
        %717 = vmatpush.bf16.msra.mxu0 0
        %718 = vmatpush.bf16.msra.mxu0 0
        %719 = vmatpush.bf16.msra.mxu0 0
        %720 = vmatpush.bf16.msra.mxu0 0
        %721 = vmatpush.bf16.msra.mxu0 0
        %722 = vmatpush.bf16.msra.mxu0 0
        %723 = vmatpush.bf16.msra.mxu0 0
        %724 = vmatpush.bf16.msra.mxu0 %v715
        %725 = vmatmul.bf16.gmra.mxu0 %v711
        %v726 = vpop.f32.mrf.mxu0
        %v727 = vadd.f32 0.0, %v726
        %v728 = vpop.f32.mrf.mxu0
        %729 = vdwg.mxu0
        %s730 = scalar_lea.vmem %s385, 16
        %v731 = vld [vmem:[%s730] sm:$0xf]
        %v732 = vld [vmem:[%s730 + $0x4] sm:$0xf]
        %v733 = vld [vmem:[%s730 + $0x8] sm:$0xf]
        %v734 = vld [vmem:[%s730 + $0xc] sm:$0xf]
        %v739 = vunpack.c.l.b16 %v731
        %v740 = vunpack.c.l.b16 %v732
        %v741 = vunpack.c.l.b16 %v733
        %v742 = vunpack.c.l.b16 %v734
        %v743 = vpack.c.b16 %v740, %v739
        %v744 = vpack.c.b16 %v742, %v741
        %747 = vmatpush.bf16.msra.mxu0 0
        %748 = vmatpush.bf16.msra.mxu0 0
        %749 = vmatpush.bf16.msra.mxu0 0
        %750 = vmatpush.bf16.msra.mxu0 0
        %751 = vmatpush.bf16.msra.mxu0 0
        %752 = vmatpush.bf16.msra.mxu0 0
        %753 = vmatpush.bf16.msra.mxu0 %v744
        %754 = vmatpush.bf16.msra.mxu0 %v743
        %755 = vmatmul.bf16.gmra.mxu0 %v481
        %v756 = vpop.f32.mrf.mxu0
        %v757 = vadd.f32 0.0, %v756
        %v758 = vpop.f32.mrf.mxu0
        %759 = vdwg.mxu0
        %v760 = vxor.u32 %v757, 2147483648
        %v761 = vmul.f32 %v760, 1.442695
        %v762 = vpow.pop %v761
        %v763 = vadd.f32 %v762, 1.0
        %v764 = vrcp.pop %v763
        %v765 = vmul.f32 %v763, %v764
        %v766 = vsub.f32 1.0, %v765
        %v767 = vmul.f32 %v764, %v766
        %v768 = vadd.f32 %v764, %v767
        %vm769 = vweird.f32 %v763
        %vm770 = vweird.f32 %v764
        %vm771 = vmor %vm769, %vm770
        %v772 = vsel %vm771, %v764, %v768
        %v773 = vand.u32 2147483647, %v763
        %vm774 = vcmp.eq.f32.partialorder %v773, 8.507059e+37
        %v775 = vand.u32 %v763, 2147483648
        %v776 = vor.u32 1.1754944e-38, %v775
        %v777 = vsel %vm774, %v776, %v772
        %v778 = vmul.f32 1.0, %v777
        %v779 = vmul.f32 %v757, %v778
        %s780 = scalar_lea.vmem %s390, 16
        %v781 = vld [vmem:[%s780] sm:$0xf]
        %v782 = vld [vmem:[%s780 + $0x4] sm:$0xf]
        %v783 = vld [vmem:[%s780 + $0x8] sm:$0xf]
        %v784 = vld [vmem:[%s780 + $0xc] sm:$0xf]
        %v789 = vunpack.c.l.b16 %v781
        %v790 = vunpack.c.l.b16 %v782
        %v791 = vunpack.c.l.b16 %v783
        %v792 = vunpack.c.l.b16 %v784
        %v793 = vpack.c.b16 %v790, %v789
        %v794 = vpack.c.b16 %v792, %v791
        %797 = vmatpush.bf16.msra.mxu0 0
        %798 = vmatpush.bf16.msra.mxu0 0
        %799 = vmatpush.bf16.msra.mxu0 0
        %800 = vmatpush.bf16.msra.mxu0 0
        %801 = vmatpush.bf16.msra.mxu0 0
        %802 = vmatpush.bf16.msra.mxu0 0
        %803 = vmatpush.bf16.msra.mxu0 %v794
        %804 = vmatpush.bf16.msra.mxu0 %v793
        %805 = vmatmul.bf16.gmra.mxu0 %v481
        %v806 = vpop.f32.mrf.mxu0
        %v807 = vadd.f32 0.0, %v806
        %v808 = vpop.f32.mrf.mxu0
        %809 = vdwg.mxu0
        %v810 = vxor.u32 %v807, 2147483648
        %v811 = vmul.f32 %v810, 1.442695
        %v812 = vpow.pop %v811
        %v813 = vadd.f32 %v812, 1.0
        %v814 = vrcp.pop %v813
        %v815 = vmul.f32 %v813, %v814
        %v816 = vsub.f32 1.0, %v815
        %v817 = vmul.f32 %v814, %v816
        %v818 = vadd.f32 %v814, %v817
        %vm819 = vweird.f32 %v813
        %vm820 = vweird.f32 %v814
        %vm821 = vmor %vm819, %vm820
        %v822 = vsel %vm821, %v814, %v818
        %v823 = vand.u32 2147483647, %v813
        %vm824 = vcmp.eq.f32.partialorder %v823, 8.507059e+37
        %v825 = vand.u32 %v813, 2147483648
        %v826 = vor.u32 1.1754944e-38, %v825
        %v827 = vsel %vm824, %v826, %v822
        %v828 = vmul.f32 1.0, %v827
        %v829 = vmul.f32 %v807, %v828
        %s830 = scalar_lea.vmem %s395, 16
        %v831 = vld [vmem:[%s830] sm:$0xf]
        %v832 = vld [vmem:[%s830 + $0x4] sm:$0xf]
        %v833 = vld [vmem:[%s830 + $0x8] sm:$0xf]
        %v834 = vld [vmem:[%s830 + $0xc] sm:$0xf]
        %v839 = vunpack.c.l.b16 %v831
        %v840 = vunpack.c.l.b16 %v832
        %v841 = vunpack.c.l.b16 %v833
        %v842 = vunpack.c.l.b16 %v834
        %v843 = vpack.c.b16 %v840, %v839
        %v844 = vpack.c.b16 %v842, %v841
        %847 = vmatpush.bf16.msra.mxu0 0
        %848 = vmatpush.bf16.msra.mxu0 0
        %849 = vmatpush.bf16.msra.mxu0 0
        %850 = vmatpush.bf16.msra.mxu0 0
        %851 = vmatpush.bf16.msra.mxu0 0
        %852 = vmatpush.bf16.msra.mxu0 0
        %853 = vmatpush.bf16.msra.mxu0 %v844
        %854 = vmatpush.bf16.msra.mxu0 %v843
        %855 = vmatmul.bf16.gmra.mxu0 %v481
        %v856 = vpop.f32.mrf.mxu0
        %v857 = vadd.f32 0.0, %v856
        %v858 = vpop.f32.mrf.mxu0
        %859 = vdwg.mxu0
        %v860 = vxor.u32 %v857, 2147483648
        %v861 = vmul.f32 %v860, 1.442695
        %v862 = vpow.pop %v861
        %v863 = vadd.f32 %v862, 1.0
        %v864 = vrcp.pop %v863
        %v865 = vmul.f32 %v863, %v864
        %v866 = vsub.f32 1.0, %v865
        %v867 = vmul.f32 %v864, %v866
        %v868 = vadd.f32 %v864, %v867
        %vm869 = vweird.f32 %v863
        %vm870 = vweird.f32 %v864
        %vm871 = vmor %vm869, %vm870
        %v872 = vsel %vm871, %v864, %v868
        %v873 = vand.u32 2147483647, %v863
        %vm874 = vcmp.eq.f32.partialorder %v873, 8.507059e+37
        %v875 = vand.u32 %v863, 2147483648
        %v876 = vor.u32 1.1754944e-38, %v875
        %v877 = vsel %vm874, %v876, %v872
        %v878 = vmul.f32 1.0, %v877
        %v879 = vmul.f32 %v857, %v878
        %s880 = scalar_lea.vmem %s400, 16
        %v881 = vld [vmem:[%s880] sm:$0xf]
        %v882 = vld [vmem:[%s880 + $0x4] sm:$0xf]
        %v883 = vld [vmem:[%s880 + $0x8] sm:$0xf]
        %v884 = vld [vmem:[%s880 + $0xc] sm:$0xf]
        %v889 = vunpack.c.l.b16 %v881
        %v890 = vunpack.c.l.b16 %v882
        %v891 = vunpack.c.l.b16 %v883
        %v892 = vunpack.c.l.b16 %v884
        %v893 = vpack.c.b16 %v890, %v889
        %v894 = vpack.c.b16 %v892, %v891
        %897 = vmatpush.bf16.msra.mxu0 0
        %898 = vmatpush.bf16.msra.mxu0 0
        %899 = vmatpush.bf16.msra.mxu0 0
        %900 = vmatpush.bf16.msra.mxu0 0
        %901 = vmatpush.bf16.msra.mxu0 0
        %902 = vmatpush.bf16.msra.mxu0 0
        %903 = vmatpush.bf16.msra.mxu0 %v894
        %904 = vmatpush.bf16.msra.mxu0 %v893
        %905 = vmatmul.bf16.gmra.mxu0 %v481
        %v906 = vpop.f32.mrf.mxu0
        %v907 = vadd.f32 0.0, %v906
        %v908 = vpop.f32.mrf.mxu0
        %909 = vdwg.mxu0
        %v910 = vxor.u32 %v907, 2147483648
        %v911 = vmul.f32 %v910, 1.442695
        %v912 = vpow.pop %v911
        %v913 = vadd.f32 %v912, 1.0
        %v914 = vrcp.pop %v913
        %v915 = vmul.f32 %v913, %v914
        %v916 = vsub.f32 1.0, %v915
        %v917 = vmul.f32 %v914, %v916
        %v918 = vadd.f32 %v914, %v917
        %vm919 = vweird.f32 %v913
        %vm920 = vweird.f32 %v914
        %vm921 = vmor %vm919, %vm920
        %v922 = vsel %vm921, %v914, %v918
        %v923 = vand.u32 2147483647, %v913
        %vm924 = vcmp.eq.f32.partialorder %v923, 8.507059e+37
        %v925 = vand.u32 %v913, 2147483648
        %v926 = vor.u32 1.1754944e-38, %v925
        %v927 = vsel %vm924, %v926, %v922
        %v928 = vmul.f32 1.0, %v927
        %v929 = vmul.f32 %v907, %v928
        %v930 = vpack.c.bf16 %v879, %v879
        %v931 = vpack.c.bf16 %v929, %v929
        %v933 = vsel %vm665, %v930, 0
        %v936 = vsel %vm665, %v931, 0
        %938 = vmatpush.bf16.xpose.msra.mxu0 0
        %939 = vmatpush.bf16.xpose.msra.mxu0 0
        %940 = vmatpush.bf16.xpose.msra.mxu0 0
        %941 = vmatpush.bf16.xpose.msra.mxu0 0
        %942 = vmatpush.bf16.xpose.msra.mxu0 0
        %943 = vmatpush.bf16.xpose.msra.mxu0 0
        %944 = vmatpush.bf16.xpose.msra.mxu0 0
        %945 = vmatpush.bf16.xpose.msra.mxu0 %v936
        %946 = vmatmul.bf16.gmra.mxu0 %v933
        %v947 = vpop.f32.mrf.mxu0
        %v948 = vadd.f32 0.0, %v947
        %v949 = vpop.f32.mrf.mxu0
        %950 = vdwg.mxu0
        %v951 = vxor.u32 %v948, 2147483648
        %v952 = vmul.f32 %v951, 1.442695
        %v953 = vpow.pop %v952
        %v954 = vadd.f32 %v953, 1.0
        %v955 = vrcp.pop %v954
        %v956 = vmul.f32 %v954, %v955
        %v957 = vsub.f32 1.0, %v956
        %v958 = vmul.f32 %v955, %v957
        %v959 = vadd.f32 %v955, %v958
        %vm960 = vweird.f32 %v954
        %vm961 = vweird.f32 %v955
        %vm962 = vmor %vm960, %vm961
        %v963 = vsel %vm962, %v955, %v959
        %v964 = vand.u32 2147483647, %v954
        %vm965 = vcmp.eq.f32.partialorder %v964, 8.507059e+37
        %v966 = vand.u32 %v954, 2147483648
        %v967 = vor.u32 1.1754944e-38, %v966
        %v968 = vsel %vm965, %v967, %v963
        %v969 = vmul.f32 1.0, %v968
        %v970 = vmul.f32 %v948, %v969
        %v971 = vmul.f32 %v970, 0.125
        %v972 = vmul.f32 %v971, %v420
        %v973 = vpack.c.bf16 %v972, %v972
        %v974 = vpack.c.bf16 %v829, %v829
        %v976 = vsel %vm709, %v973, 0
        %v979 = vsel %vm713, %v974, 0
        %981 = vmatpush.bf16.msra.mxu0 0
        %982 = vmatpush.bf16.msra.mxu0 0
        %983 = vmatpush.bf16.msra.mxu0 0
        %984 = vmatpush.bf16.msra.mxu0 0
        %985 = vmatpush.bf16.msra.mxu0 0
        %986 = vmatpush.bf16.msra.mxu0 0
        %987 = vmatpush.bf16.msra.mxu0 0
        %988 = vmatpush.bf16.msra.mxu0 %v979
        %989 = vmatmul.bf16.gmra.mxu0 %v976
        %v990 = vpop.f32.mrf.mxu0
        %v991 = vadd.f32 0.0, %v990
        %v992 = vpop.f32.mrf.mxu0
        %993 = vdwg.mxu0
        %v994 = vsel %vm665, %v727, 0.0
        %995 = vadd.xlane.f32.xlu0 %v994
        %v996 = vpop.xlane.xlu0 %995
        %v997 = vadd.f32 %v996, 0.0
        %v998 = vsel %vm665, %v991, 0.0
        %999 = vadd.xlane.f32.xlu0 %v998
        %v1000 = vpop.xlane.xlu0 %999
        %v1001 = vadd.f32 %v997, %v1000
        %v1002 = vmul.f32 %v1001, 0.03125
        %v1003 = vsub.f32 %v727, %v1002
        %v1004 = vmul.f32 %v1003, %v1003
        %v1005 = vsel %vm665, %v1004, 0.0
        %1006 = vadd.xlane.f32.xlu0 %v1005
        %v1007 = vpop.xlane.xlu0 %1006
        %v1008 = vadd.f32 %v1007, 0.0
        %v1009 = vsub.f32 %v991, %v1002
        %v1010 = vmul.f32 %v1009, %v1009
        %v1011 = vsel %vm665, %v1010, 0.0
        %1012 = vadd.xlane.f32.xlu0 %v1011
        %v1013 = vpop.xlane.xlu0 %1012
        %v1014 = vadd.f32 %v1008, %v1013
        %v1015 = vmul.f32 %v1014, 0.03125
        %v1016 = vadd.f32 %v1015, 1e-06
        %v1017 = vrsqrt.pop %v1016
        %v1018 = vmul.f32 %v1017, %v1016
        %v1019 = vmul.f32 %v1018, %v1017
        %v1020 = vmul.f32 0.5, %v1019
        %v1021 = vsub.f32 1.5, %v1020
        %v1022 = vmul.f32 %v1017, %v1021
        %vm1023 = vweird.f32 %v1016
        %vm1024 = vweird.f32 %v1017
        %vm1025 = vmor %vm1023, %vm1024
        %v1026 = vsel %vm1025, %v1017, %v1022
        %v1027 = vld [vmem:[%s408] sm:$0x1]
        %v1028 = vmul.f32 %v1003, %v1026
        %v1029 = vmul.f32 %v515, %v1028
        %v1030 = vpack.c.bf16 %v1029, %v1029
        %v1031 = vld [vmem:[%s405] sm:$0xf]
        %v1032 = vld [vmem:[%s405 + $0x4] sm:$0xf]
        %v1035 = vunpack.c.l.b16 %v1031
        %v1036 = vunpack.c.l.b16 %v1032
        %v1037 = vpack.c.b16 %v1036, %v1035
        %v1040 = vsel %vm665, %v1030, 0
        %1042 = vmatpush.bf16.msra.mxu0 0
        %1043 = vmatpush.bf16.msra.mxu0 0
        %1044 = vmatpush.bf16.msra.mxu0 0
        %1045 = vmatpush.bf16.msra.mxu0 0
        %1046 = vmatpush.bf16.msra.mxu0 0
        %1047 = vmatpush.bf16.msra.mxu0 0
        %1048 = vmatpush.bf16.msra.mxu0 0
        %1049 = vmatpush.bf16.msra.mxu0 %v1037
        %1050 = vmatmul.bf16.gmra.mxu0 %v1040
        %v1051 = vpop.f32.mrf.mxu0
        %v1052 = vadd.f32 0.0, %v1051
        %v1053 = vpop.f32.mrf.mxu0
        %1054 = vdwg.mxu0
        %v1056 = vperm.slane %v1027, 0
        %v1058 = vadd.f32 %v1056, %v1052
        %v1059 = vmul.f32 %v1009, %v1026
        %v1060 = vmul.f32 %v779, %v1059
        %v1061 = vpack.c.bf16 %v1060, %v1060
        %s1062 = scalar_lea.vmem %s405, 8
        %v1063 = vld [vmem:[%s1062] sm:$0xf]
        %v1064 = vld [vmem:[%s1062 + $0x4] sm:$0xf]
        %v1067 = vunpack.c.l.b16 %v1063
        %v1068 = vunpack.c.l.b16 %v1064
        %v1069 = vpack.c.b16 %v1068, %v1067
        %v1072 = vsel %vm665, %v1061, 0
        %1074 = vmatpush.bf16.msra.mxu0 0
        %1075 = vmatpush.bf16.msra.mxu0 0
        %1076 = vmatpush.bf16.msra.mxu0 0
        %1077 = vmatpush.bf16.msra.mxu0 0
        %1078 = vmatpush.bf16.msra.mxu0 0
        %1079 = vmatpush.bf16.msra.mxu0 0
        %1080 = vmatpush.bf16.msra.mxu0 0
        %1081 = vmatpush.bf16.msra.mxu0 %v1069
        %1082 = vmatmul.bf16.gmra.mxu0 %v1072
        %v1083 = vpop.f32.mrf.mxu0
        %v1084 = vadd.f32 0.0, %v1083
        %v1085 = vpop.f32.mrf.mxu0
        %1086 = vdwg.mxu0
        %v1087 = vadd.f32 %v1058, %v1084
        %v1088 = vadd.f32 %v1087, %v432
        %1089 = vst.msk [vmem:[#allocation2] sm:$0xff] %vm433, %v1088
        %p1090 = scmp.eq.s32.totalorder %s35, 1
        // Predicated region
        $region53: #{tpu_custom_call.1} parent=47 // pred_check
          %p1091 = pneg %p1090
        $region54: #{tpu_custom_call.1} parent=47 // pred_check_branch
          %1093 = sbr.rel (%p1091) target = $region56
        $region55: #{tpu_custom_call.1} parent=47 // pred_region
          %v1094 = vmul.f32 %v1088, %v423
          %1095 = vst.msk [vmem:[%s376] sm:$0xff] %vm433, %v1094
        $region56: #{tpu_custom_call.1} parent=47 // pred_fallthru
          _
        %s1096 = sand.u32 %s232, 1
        %s1097 = scalar_lea.sflag [#allocation6], %s1096
        %s1098 = sand.u32 %s232, 1
        %s1099 = smul.addr %s1098, 8
        %s1100 = scalar_lea.vmem [#allocation5], %s1099
        // Predicated region
        $region57: #{tpu_custom_call.1} parent=47 // pred_check
          %p1101 = pneg %p242
        $region58: #{tpu_custom_call.1} parent=47 // pred_check_branch
          %1103 = sbr.rel (%p1101) target = $region60
        $region59: #{tpu_custom_call.1} parent=47 // pred_region
          %1105 = vsyncadd %s1097, 0
          %s1106 = smul.addr %s34, 8
          %s1107 = scalar_lea.hbm %s8, %s1106
          %s1109 = sshll.u32 %s1100, 4
          %s1110 = int_to_ptr.vmem [resolvable:$true] %s1109
          %s1111 = sshll.u32 %s1107, 4
          %s1112 = int_to_ptr.hbm [resolvable:$true] %s1111
          %1114 = dma.vmem_to_hbm [thread:$0]  %s1110, 128, %s1112, %s1097
        $region60: #{tpu_custom_call.1} parent=47 // pred_fallthru
          _
      $region48: #{tpu_custom_call.1} parent=5 // pred_fallthru
        _
      %p1115 = scmp.le.s32.totalorder 2, %s25
      // Predicated region
      $region61: #{tpu_custom_call.1} parent=5 // pred_check
        %p1116 = pneg %p1115
      $region62: #{tpu_custom_call.1} parent=5 // pred_check_branch
        %1118 = sbr.rel (%p1116) target = $region64
      $region63: #{tpu_custom_call.1} parent=5 // pred_region
        %s1119 = ssub.s32 %s25, 2
        // Predicated region
        $region65: #{tpu_custom_call.1} parent=63 // pred_check
          %p1120 = pneg %p248
        $region66: #{tpu_custom_call.1} parent=63 // pred_check_branch
          %1122 = sbr.rel (%p1120) target = $region68
        $region67: #{tpu_custom_call.1} parent=63 // pred_region
          %s1123 = sand.u32 %s233, 1
          %s1124 = scalar_lea.sflag [#allocation6], %s1123
          %s1125 = sand.u32 %s233, 1
          %s1126 = smul.addr %s1125, 8
          %s1127 = scalar_lea.vmem [#allocation5], %s1126
          %1129 = dma.done %s1124, 128
        $region68: #{tpu_custom_call.1} parent=63 // pred_fallthru
          _
      $region64: #{tpu_custom_call.1} parent=5 // pred_fallthru
        _
    $region6: #{tpu_custom_call.1} parent=1 // loop_footer
      %s29 = sadd.s32 1, %s25
    $region7: #{tpu_custom_call.1} parent=1 // loop_footer_branch
      %24 = sbr.rel target = $region3
    $region8: #{tpu_custom_call.1} parent=1 // loop_exit
      _
    %1130 = vsyncpa [#allocation6], 1
    %s1131 = scalar_lea.sflag [#allocation6], 1
    %1132 = vsyncpa %s1131, 1

</llo_original>
